<compile_context>
chip_gen: v7x
topology: tpu7x:2x2x1
jax: 0.10.0
libtpu: 0.0.40
codegen_flags: <defaults>
</compile_context>

<pallas_src>
import functools
import math

import jax
import jax.numpy as jnp
from jax.experimental import pallas as pl
from jax.experimental.pallas import tpu as pltpu

_SHIFT = math.log(2.0)
_LANE = 1024                    # lane-dense last dim (multiple of 128)
_SMALL_FALLBACK_ELEMS = 65536   # below this, XLA softplus beats Pallas dispatch


def _round_up(n: int, m: int) -> int:
    return ((n + m - 1) // m) * m


def _chip_generation() -> int:
    """Best-effort TPU generation from device_kind ('TPU v5e', 'TPU v6 lite', ...)."""
    try:
        kind = jax.devices()[0].device_kind.lower()
    except Exception:
        return 0
    for g in (7, 6, 5, 4):
        if f"v{g}" in kind:
            return g
    return 0


def _shifted_softplus_kernel(x_ref, o_ref, *, compute_dtype):
    # Numerically stable softplus: max(x,0) + log1p(exp(-|x|)).
    x = x_ref[...].astype(compute_dtype)
    sp = jnp.maximum(x, 0.0) + jnp.log1p(jnp.exp(-jnp.abs(x)))
    o_ref[...] = (sp - _SHIFT).astype(o_ref.dtype)


def _launch(x2d: jax.Array, compute_dtype, tile_m: int, vmem_limit: int) -> jax.Array:
    rows, _ = x2d.shape
    kernel = functools.partial(_shifted_softplus_kernel, compute_dtype=compute_dtype)
    return pl.pallas_call(
        kernel,
        out_shape=jax.ShapeDtypeStruct(x2d.shape, x2d.dtype),
        grid=(pl.cdiv(rows, tile_m),),              # partial last block is masked
        in_specs=[pl.BlockSpec((tile_m, _LANE), lambda i: (i, 0))],
        out_specs=pl.BlockSpec((tile_m, _LANE), lambda i: (i, 0)),
        compiler_params=pltpu.CompilerParams(
            dimension_semantics=("parallel",),
            vmem_limit_bytes=vmem_limit,
        ),
    )(x2d)


def shifted_softplus(x: jax.Array) -> jax.Array:
    """Elementwise shifted softplus via a tiled, lane-dense Pallas kernel."""
    orig_shape = x.shape
    dtype = x.dtype
    total = x.size
    if total == 0:
        return x

    # Small-input fallback: SchNet-sized activations don't amortize a Pallas launch.
    if total < _SMALL_FALLBACK_ELEMS:
        return jax.nn.softplus(x) - jnp.asarray(_SHIFT, dtype)

    gen = _chip_generation()
    itemsize = jnp.dtype(dtype).itemsize
    # dtype-aware sublane multiple (sub-32-bit dtypes pack along sublanes).
    sub = {4: 8, 2: 16, 1: 32}.get(itemsize, 8)

    # Block size in bytes: bigger on v7x where per-grid-step overhead is large
    # relative to its fast HBM; 2 MiB already ~85% of roofline on v5e/v6e.
    block_bytes = (8 << 20) if gen >= 7 else (2 << 20)
    max_tile_rows = max(sub, (block_bytes // (_LANE * itemsize) // sub) * sub)
    vmem_limit = (48 << 20) if gen >= 7 else (32 << 20)

    # bf16 EUP math on v6e/v7x; f32 math for f32 inputs and on v5e (no bf16 EUP).
    if dtype == jnp.bfloat16 and gen >= 6:
        compute_dtype = jnp.bfloat16
    else:
        compute_dtype = jnp.float32

    flat = x.reshape(-1)
    rows = total // _LANE          # full lane-dense rows (no padding of the tensor)
    tail = total - rows * _LANE    # < _LANE leftover elements

    tile_m = max_tile_rows if rows >= max_tile_rows else _round_up(rows, sub)
    # Give v7x's two TensorCores at least two grid steps to shard across.
    if gen >= 7 and pl.cdiv(rows, tile_m) < 2 and rows > sub:
        tile_m = max(sub, _round_up(pl.cdiv(rows, 2), sub))

    bulk_flat = flat[: rows * _LANE] if tail else flat
    x2d = bulk_flat.reshape(rows, _LANE)
    out_flat = _launch(x2d, compute_dtype, tile_m, vmem_limit).reshape(-1)

    if tail:
        # Tiny (<1024 elem) tail handled outside the kernel; one small concat
        # instead of full-tensor pad + slice round trips.
        tail_out = jax.nn.softplus(flat[rows * _LANE:]) - jnp.asarray(_SHIFT, dtype)
        out_flat = jnp.concatenate([out_flat, tail_out])

    return out_flat.reshape(orig_shape)


def shifted_softplus_ref(x: jax.Array) -> jax.Array:
    return (jax.nn.softplus(x.astype(jnp.float32)) - _SHIFT).astype(x.dtype)


if __name__ == "__main__":
    key = jax.random.PRNGKey(0)
    k1, k2, k3, k4, k5 = jax.random.split(key, 5)

    # 1) SchNet-style node features (small) -> XLA fallback path.
    x_small = jax.random.normal(k1, (16, 64), dtype=jnp.float32) * 3.0
    y_small = jax.block_until_ready(shifted_softplus(x_small))
    assert y_small.shape == x_small.shape and y_small.dtype == x_small.dtype
    assert jnp.allclose(y_small, shifted_softplus_ref(x_small), atol=1e-6, rtol=1e-6)

    # 2) Ragged small shape -> fallback path.
    x_rag = jax.random.normal(k2, (7, 33), dtype=jnp.float32) * 2.0
    y_rag = jax.block_until_ready(shifted_softplus(x_rag))
    assert y_rag.shape == x_rag.shape
    assert jnp.allclose(y_rag, shifted_softplus_ref(x_rag), atol=1e-6, rtol=1e-6)

    # 3) Larger f32 batch -> Pallas kernel path (lane-aligned, partial row block).
    x_big = jax.random.normal(k3, (136, 1024), dtype=jnp.float32) * 3.0
    y_big = jax.block_until_ready(shifted_softplus(x_big))
    assert jnp.allclose(y_big, shifted_softplus_ref(x_big), atol=1e-6, rtol=1e-6)

    # 4) Larger ragged f32 -> kernel bulk + XLA tail path (no full-tensor pad/slice).
    x_rag_big = jax.random.normal(k4, (300, 700), dtype=jnp.float32) * 2.0
    y_rag_big = jax.block_until_ready(shifted_softplus(x_rag_big))
    assert y_rag_big.shape == x_rag_big.shape
    assert jnp.allclose(y_rag_big, shifted_softplus_ref(x_rag_big), atol=1e-6, rtol=1e-6)

    # 5) bf16 -> kernel path (bf16 EUP math on v6e/v7x, f32 upcast on v5e).
    x_bf = (jax.random.normal(k5, (256, 1024), dtype=jnp.float32) * 3.0).astype(jnp.bfloat16)
    y_bf = jax.block_until_ready(shifted_softplus(x_bf))
    assert y_bf.dtype == jnp.bfloat16
    assert jnp.allclose(y_bf.astype(jnp.float32),
                        shifted_softplus_ref(x_bf).astype(jnp.float32),
                        atol=2e-2, rtol=2e-2)

    # Sanity: shifted softplus of 0 is exactly 0 (kernel path).
    z = jax.block_until_ready(shifted_softplus(jnp.zeros((128, 1024), jnp.float32)))
    assert jnp.allclose(z, 0.0, atol=1e-6)

    print("KERNEL_OK")
</pallas_src>

<mosaic_0001>
module attributes {stable_mosaic.version = 11 : i64} {
  func.func @_shifted_softplus_kernel(%arg0: i32, %arg1: memref<136x1024xf32, #tpu.memory_space<vmem>>, %arg2: memref<136x1024xf32, #tpu.memory_space<vmem>>) attributes {dimension_semantics = [#tpu.dimension_semantics<parallel>], iteration_bounds = array<i64: 1>, scalar_prefetch = 0 : i64, scratch_operands = 0 : i64, tpu.core_type = #tpu.core_type<tc>, window_params = [{transform_indices = @transform_0, window_bounds = array<i64: 136, 1024>}, {transform_indices = @transform_1, window_bounds = array<i64: 136, 1024>}]} {
    %c0 = arith.constant 0 : index
    %c0_0 = arith.constant 0 : index
    %0 = vector.load %arg1[%c0, %c0_0] : memref<136x1024xf32, #tpu.memory_space<vmem>>, vector<136x1024xf32>
    %cst = arith.constant 0.000000e+00 : f32
    %1 = vector.broadcast %cst : f32 to vector<136x1024xf32>
    %2 = arith.maximumf %0, %1 : vector<136x1024xf32>
    %3 = math.absf %0 : vector<136x1024xf32>
    %cst_1 = arith.constant 0.000000e+00 : f32
    %4 = vector.broadcast %cst_1 : f32 to vector<136x1024xf32>
    %5 = arith.subf %4, %3 : vector<136x1024xf32>
    %6 = math.exp %5 : vector<136x1024xf32>
    %7 = math.log1p %6 : vector<136x1024xf32>
    %8 = arith.addf %2, %7 : vector<136x1024xf32>
    %cst_2 = arith.constant 0.693147182 : f32
    %9 = vector.broadcast %cst_2 : f32 to vector<136x1024xf32>
    %10 = arith.subf %8, %9 : vector<136x1024xf32>
    %c0_3 = arith.constant 0 : index
    %c0_4 = arith.constant 0 : index
    %11 = vector.load %arg2[%c0_3, %c0_4] : memref<136x1024xf32, #tpu.memory_space<vmem>>, vector<136x1024xf32>
    tpu.vector_store %arg2[%c0_3, %c0_4], %10 {strides = array<i32>} : memref<136x1024xf32, #tpu.memory_space<vmem>>, vector<136x1024xf32>,
    return
  }
  func.func @transform_0(%arg0: i32) -> (i32, i32) {
    %c0_i32 = arith.constant 0 : i32
    %c0_i32_0 = arith.constant 0 : i32
    return %arg0, %c0_i32 : i32, i32
  }
  func.func @transform_1(%arg0: i32) -> (i32, i32) {
    %c0_i32 = arith.constant 0 : i32
    %c0_i32_0 = arith.constant 0 : i32
    return %arg0, %c0_i32 : i32, i32
  }
}

</mosaic_0001>

<llo_original>
// kernel: tpu_custom_call.1
$region0: #{tpu_custom_call.1}
  #allocation0 [shape = 'u32[]', space=smem, size = 0x4, offset = 0x4, fixed_abs, tag = 'smem constant byte address 0x4 - core index']
  #allocation1 [shape = 'u32[144,128]{1,0:T(1,128)}', space=vmem, size = 0x12000, scoped, tag = 'internal scratch']
  %s0 = inlined_call_operand.hbm [shape: f32[136,1024], index: 0, kind: input, shape index: {}]
  %s1 = inlined_call_operand.hbm [shape: f32[136,1024], index: 1, kind: output, shape index: {}]
  %s2 = sld [smem:[#allocation0]]
  $region18: #{tpu_custom_call.1} parent=0
    _
  %s4 = ssub.s32 1, %s2
  %s5 = scalar_select 0, %s4, %s2
  $region1: #{tpu_custom_call.1} parent=0
    #allocation2 [shape = 'u8[557056]{0}', space=vmem, size = 0x88000, scoped, tag = 'input window, operand 0, single buffered']
    #allocation3 [shape = 's32[1]{0}', space=sflag, size = 0x4, scoped, tag = 'scoped memory for tpu_custom_call.1']
    #allocation4 [shape = 's32[1]{0}', space=sflag, size = 0x4, scoped, tag = 'scoped memory for tpu_custom_call.1']
    #allocation5 [shape = 'u8[557056]{0}', space=vmem, size = 0x88000, scoped, tag = 'output window, operand 0, single buffered']
    %6 = vsyncpa [#allocation3], 0
    %7 = vsyncpa [#allocation4], 0
    // Predicated region
    $region2: #{tpu_custom_call.1} parent=1 // pred_check
      _
    $region3: #{tpu_custom_call.1} parent=1 // pred_check_branch
      %9 = sbr.rel (0) target = $region5
    $region4: #{tpu_custom_call.1} parent=1 // pred_region
      %s11 = ssub.s32 17408, 17408
      %12 = vsyncadd [#allocation3], %s11
      %s13 = sshll.u32 [#allocation2], 4
      %s14 = int_to_ptr.vmem [resolvable:$true] %s13
      %19 = dma.hbm_to_vmem [thread:$0]  %s0, 17408, %s14, [#allocation3], 1024, 1024, 64
    $region5: #{tpu_custom_call.1} parent=1 // pred_fallthru
      _
    // Predicated region
    $region6: #{tpu_custom_call.1} parent=1 // pred_check
      _
    $region7: #{tpu_custom_call.1} parent=1 // pred_check_branch
      %21 = sbr.rel (0) target = $region9
    $region8: #{tpu_custom_call.1} parent=1 // pred_region
      %22 = dma.done [#allocation3], 17408
    $region9: #{tpu_custom_call.1} parent=1 // pred_fallthru
      _
    %v23 = vld [vmem:[#allocation2] sm:$0xff]
    %v24 = vld [vmem:[#allocation2 + $0x8] sm:$0xff]
    %v25 = vld [vmem:[#allocation2 + $0x10] sm:$0xff]
    %v26 = vld [vmem:[#allocation2 + $0x18] sm:$0xff]
    %v27 = vld [vmem:[#allocation2 + $0x20] sm:$0xff]
    %v28 = vld [vmem:[#allocation2 + $0x28] sm:$0xff]
    %v29 = vld [vmem:[#allocation2 + $0x30] sm:$0xff]
    %v30 = vld [vmem:[#allocation2 + $0x38] sm:$0xff]
    %v31 = vld [vmem:[#allocation2 + $0x40] sm:$0xff]
    %v32 = vld [vmem:[#allocation2 + $0x48] sm:$0xff]
    %v33 = vld [vmem:[#allocation2 + $0x50] sm:$0xff]
    %v34 = vld [vmem:[#allocation2 + $0x58] sm:$0xff]
    %v35 = vld [vmem:[#allocation2 + $0x60] sm:$0xff]
    %v36 = vld [vmem:[#allocation2 + $0x68] sm:$0xff]
    %v37 = vld [vmem:[#allocation2 + $0x70] sm:$0xff]
    %v38 = vld [vmem:[#allocation2 + $0x78] sm:$0xff]
    %v39 = vld [vmem:[#allocation2 + $0x80] sm:$0xff]
    %v40 = vld [vmem:[#allocation2 + $0x88] sm:$0xff]
    %v41 = vld [vmem:[#allocation2 + $0x90] sm:$0xff]
    %v42 = vld [vmem:[#allocation2 + $0x98] sm:$0xff]
    %v43 = vld [vmem:[#allocation2 + $0xa0] sm:$0xff]
    %v44 = vld [vmem:[#allocation2 + $0xa8] sm:$0xff]
    %v45 = vld [vmem:[#allocation2 + $0xb0] sm:$0xff]
    %v46 = vld [vmem:[#allocation2 + $0xb8] sm:$0xff]
    %v47 = vld [vmem:[#allocation2 + $0xc0] sm:$0xff]
    %v48 = vld [vmem:[#allocation2 + $0xc8] sm:$0xff]
    %v49 = vld [vmem:[#allocation2 + $0xd0] sm:$0xff]
    %v50 = vld [vmem:[#allocation2 + $0xd8] sm:$0xff]
    %v51 = vld [vmem:[#allocation2 + $0xe0] sm:$0xff]
    %v52 = vld [vmem:[#allocation2 + $0xe8] sm:$0xff]
    %v53 = vld [vmem:[#allocation2 + $0xf0] sm:$0xff]
    %v54 = vld [vmem:[#allocation2 + $0xf8] sm:$0xff]
    %v55 = vld [vmem:[#allocation2 + $0x100] sm:$0xff]
    %v56 = vld [vmem:[#allocation2 + $0x108] sm:$0xff]
    %v57 = vld [vmem:[#allocation2 + $0x110] sm:$0xff]
    %v58 = vld [vmem:[#allocation2 + $0x118] sm:$0xff]
    %v59 = vld [vmem:[#allocation2 + $0x120] sm:$0xff]
    %v60 = vld [vmem:[#allocation2 + $0x128] sm:$0xff]
    %v61 = vld [vmem:[#allocation2 + $0x130] sm:$0xff]
    %v62 = vld [vmem:[#allocation2 + $0x138] sm:$0xff]
    %v63 = vld [vmem:[#allocation2 + $0x140] sm:$0xff]
    %v64 = vld [vmem:[#allocation2 + $0x148] sm:$0xff]
    %v65 = vld [vmem:[#allocation2 + $0x150] sm:$0xff]
    %v66 = vld [vmem:[#allocation2 + $0x158] sm:$0xff]
    %v67 = vld [vmem:[#allocation2 + $0x160] sm:$0xff]
    %v68 = vld [vmem:[#allocation2 + $0x168] sm:$0xff]
    %v69 = vld [vmem:[#allocation2 + $0x170] sm:$0xff]
    %v70 = vld [vmem:[#allocation2 + $0x178] sm:$0xff]
    %v71 = vld [vmem:[#allocation2 + $0x180] sm:$0xff]
    %v72 = vld [vmem:[#allocation2 + $0x188] sm:$0xff]
    %v73 = vld [vmem:[#allocation2 + $0x190] sm:$0xff]
    %v74 = vld [vmem:[#allocation2 + $0x198] sm:$0xff]
    %v75 = vld [vmem:[#allocation2 + $0x1a0] sm:$0xff]
    %v76 = vld [vmem:[#allocation2 + $0x1a8] sm:$0xff]
    %v77 = vld [vmem:[#allocation2 + $0x1b0] sm:$0xff]
    %v78 = vld [vmem:[#allocation2 + $0x1b8] sm:$0xff]
    %v79 = vld [vmem:[#allocation2 + $0x1c0] sm:$0xff]
    %v80 = vld [vmem:[#allocation2 + $0x1c8] sm:$0xff]
    %v81 = vld [vmem:[#allocation2 + $0x1d0] sm:$0xff]
    %v82 = vld [vmem:[#allocation2 + $0x1d8] sm:$0xff]
    %v83 = vld [vmem:[#allocation2 + $0x1e0] sm:$0xff]
    %v84 = vld [vmem:[#allocation2 + $0x1e8] sm:$0xff]
    %v85 = vld [vmem:[#allocation2 + $0x1f0] sm:$0xff]
    %v86 = vld [vmem:[#allocation2 + $0x1f8] sm:$0xff]
    %v87 = vld [vmem:[#allocation2 + $0x200] sm:$0xff]
    %v88 = vld [vmem:[#allocation2 + $0x208] sm:$0xff]
    %v89 = vld [vmem:[#allocation2 + $0x210] sm:$0xff]
    %v90 = vld [vmem:[#allocation2 + $0x218] sm:$0xff]
    %v91 = vld [vmem:[#allocation2 + $0x220] sm:$0xff]
    %v92 = vld [vmem:[#allocation2 + $0x228] sm:$0xff]
    %v93 = vld [vmem:[#allocation2 + $0x230] sm:$0xff]
    %v94 = vld [vmem:[#allocation2 + $0x238] sm:$0xff]
    %v95 = vld [vmem:[#allocation2 + $0x240] sm:$0xff]
    %v96 = vld [vmem:[#allocation2 + $0x248] sm:$0xff]
    %v97 = vld [vmem:[#allocation2 + $0x250] sm:$0xff]
    %v98 = vld [vmem:[#allocation2 + $0x258] sm:$0xff]
    %v99 = vld [vmem:[#allocation2 + $0x260] sm:$0xff]
    %v100 = vld [vmem:[#allocation2 + $0x268] sm:$0xff]
    %v101 = vld [vmem:[#allocation2 + $0x270] sm:$0xff]
    %v102 = vld [vmem:[#allocation2 + $0x278] sm:$0xff]
    %v103 = vld [vmem:[#allocation2 + $0x280] sm:$0xff]
    %v104 = vld [vmem:[#allocation2 + $0x288] sm:$0xff]
    %v105 = vld [vmem:[#allocation2 + $0x290] sm:$0xff]
    %v106 = vld [vmem:[#allocation2 + $0x298] sm:$0xff]
    %v107 = vld [vmem:[#allocation2 + $0x2a0] sm:$0xff]
    %v108 = vld [vmem:[#allocation2 + $0x2a8] sm:$0xff]
    %v109 = vld [vmem:[#allocation2 + $0x2b0] sm:$0xff]
    %v110 = vld [vmem:[#allocation2 + $0x2b8] sm:$0xff]
    %v111 = vld [vmem:[#allocation2 + $0x2c0] sm:$0xff]
    %v112 = vld [vmem:[#allocation2 + $0x2c8] sm:$0xff]
    %v113 = vld [vmem:[#allocation2 + $0x2d0] sm:$0xff]
    %v114 = vld [vmem:[#allocation2 + $0x2d8] sm:$0xff]
    %v115 = vld [vmem:[#allocation2 + $0x2e0] sm:$0xff]
    %v116 = vld [vmem:[#allocation2 + $0x2e8] sm:$0xff]
    %v117 = vld [vmem:[#allocation2 + $0x2f0] sm:$0xff]
    %v118 = vld [vmem:[#allocation2 + $0x2f8] sm:$0xff]
    %v119 = vld [vmem:[#allocation2 + $0x300] sm:$0xff]
    %v120 = vld [vmem:[#allocation2 + $0x308] sm:$0xff]
    %v121 = vld [vmem:[#allocation2 + $0x310] sm:$0xff]
    %v122 = vld [vmem:[#allocation2 + $0x318] sm:$0xff]
    %v123 = vld [vmem:[#allocation2 + $0x320] sm:$0xff]
    %v124 = vld [vmem:[#allocation2 + $0x328] sm:$0xff]
    %v125 = vld [vmem:[#allocation2 + $0x330] sm:$0xff]
    %v126 = vld [vmem:[#allocation2 + $0x338] sm:$0xff]
    %v127 = vld [vmem:[#allocation2 + $0x340] sm:$0xff]
    %v128 = vld [vmem:[#allocation2 + $0x348] sm:$0xff]
    %v129 = vld [vmem:[#allocation2 + $0x350] sm:$0xff]
    %v130 = vld [vmem:[#allocation2 + $0x358] sm:$0xff]
    %v131 = vld [vmem:[#allocation2 + $0x360] sm:$0xff]
    %v132 = vld [vmem:[#allocation2 + $0x368] sm:$0xff]
    %v133 = vld [vmem:[#allocation2 + $0x370] sm:$0xff]
    %v134 = vld [vmem:[#allocation2 + $0x378] sm:$0xff]
    %v135 = vld [vmem:[#allocation2 + $0x380] sm:$0xff]
    %v136 = vld [vmem:[#allocation2 + $0x388] sm:$0xff]
    %v137 = vld [vmem:[#allocation2 + $0x390] sm:$0xff]
    %v138 = vld [vmem:[#allocation2 + $0x398] sm:$0xff]
    %v139 = vld [vmem:[#allocation2 + $0x3a0] sm:$0xff]
    %v140 = vld [vmem:[#allocation2 + $0x3a8] sm:$0xff]
    %v141 = vld [vmem:[#allocation2 + $0x3b0] sm:$0xff]
    %v142 = vld [vmem:[#allocation2 + $0x3b8] sm:$0xff]
    %v143 = vld [vmem:[#allocation2 + $0x3c0] sm:$0xff]
    %v144 = vld [vmem:[#allocation2 + $0x3c8] sm:$0xff]
    %v145 = vld [vmem:[#allocation2 + $0x3d0] sm:$0xff]
    %v146 = vld [vmem:[#allocation2 + $0x3d8] sm:$0xff]
    %v147 = vld [vmem:[#allocation2 + $0x3e0] sm:$0xff]
    %v148 = vld [vmem:[#allocation2 + $0x3e8] sm:$0xff]
    %v149 = vld [vmem:[#allocation2 + $0x3f0] sm:$0xff]
    %v150 = vld [vmem:[#allocation2 + $0x3f8] sm:$0xff]
    %v151 = vld [vmem:[#allocation2 + $0x400] sm:$0xff]
    %v152 = vld [vmem:[#allocation2 + $0x408] sm:$0xff]
    %v153 = vld [vmem:[#allocation2 + $0x410] sm:$0xff]
    %v154 = vld [vmem:[#allocation2 + $0x418] sm:$0xff]
    %v155 = vld [vmem:[#allocation2 + $0x420] sm:$0xff]
    %v156 = vld [vmem:[#allocation2 + $0x428] sm:$0xff]
    %v157 = vld [vmem:[#allocation2 + $0x430] sm:$0xff]
    %v158 = vld [vmem:[#allocation2 + $0x438] sm:$0xff]
    %v159 = vmax.f32 %v23, 0.0
    %v160 = vmax.f32 %v24, 0.0
    %v161 = vmax.f32 %v25, 0.0
    %v162 = vmax.f32 %v26, 0.0
    %v163 = vmax.f32 %v27, 0.0
    %v164 = vmax.f32 %v28, 0.0
    %v165 = vmax.f32 %v29, 0.0
    %v166 = vmax.f32 %v30, 0.0
    %v167 = vmax.f32 %v31, 0.0
    %v168 = vmax.f32 %v32, 0.0
    %v169 = vmax.f32 %v33, 0.0
    %v170 = vmax.f32 %v34, 0.0
    %v171 = vmax.f32 %v35, 0.0
    %v172 = vmax.f32 %v36, 0.0
    %v173 = vmax.f32 %v37, 0.0
    %v174 = vmax.f32 %v38, 0.0
    %v175 = vmax.f32 %v39, 0.0
    %v176 = vmax.f32 %v40, 0.0
    %v177 = vmax.f32 %v41, 0.0
    %v178 = vmax.f32 %v42, 0.0
    %v179 = vmax.f32 %v43, 0.0
    %v180 = vmax.f32 %v44, 0.0
    %v181 = vmax.f32 %v45, 0.0
    %v182 = vmax.f32 %v46, 0.0
    %v183 = vmax.f32 %v47, 0.0
    %v184 = vmax.f32 %v48, 0.0
    %v185 = vmax.f32 %v49, 0.0
    %v186 = vmax.f32 %v50, 0.0
    %v187 = vmax.f32 %v51, 0.0
    %v188 = vmax.f32 %v52, 0.0
    %v189 = vmax.f32 %v53, 0.0
    %v190 = vmax.f32 %v54, 0.0
    %v191 = vmax.f32 %v55, 0.0
    %v192 = vmax.f32 %v56, 0.0
    %v193 = vmax.f32 %v57, 0.0
    %v194 = vmax.f32 %v58, 0.0
    %v195 = vmax.f32 %v59, 0.0
    %v196 = vmax.f32 %v60, 0.0
    %v197 = vmax.f32 %v61, 0.0
    %v198 = vmax.f32 %v62, 0.0
    %v199 = vmax.f32 %v63, 0.0
    %v200 = vmax.f32 %v64, 0.0
    %v201 = vmax.f32 %v65, 0.0
    %v202 = vmax.f32 %v66, 0.0
    %v203 = vmax.f32 %v67, 0.0
    %v204 = vmax.f32 %v68, 0.0
    %v205 = vmax.f32 %v69, 0.0
    %v206 = vmax.f32 %v70, 0.0
    %v207 = vmax.f32 %v71, 0.0
    %v208 = vmax.f32 %v72, 0.0
    %v209 = vmax.f32 %v73, 0.0
    %v210 = vmax.f32 %v74, 0.0
    %v211 = vmax.f32 %v75, 0.0
    %v212 = vmax.f32 %v76, 0.0
    %v213 = vmax.f32 %v77, 0.0
    %v214 = vmax.f32 %v78, 0.0
    %v215 = vmax.f32 %v79, 0.0
    %v216 = vmax.f32 %v80, 0.0
    %v217 = vmax.f32 %v81, 0.0
    %v218 = vmax.f32 %v82, 0.0
    %v219 = vmax.f32 %v83, 0.0
    %v220 = vmax.f32 %v84, 0.0
    %v221 = vmax.f32 %v85, 0.0
    %v222 = vmax.f32 %v86, 0.0
    %v223 = vmax.f32 %v87, 0.0
    %v224 = vmax.f32 %v88, 0.0
    %v225 = vmax.f32 %v89, 0.0
    %v226 = vmax.f32 %v90, 0.0
    %v227 = vmax.f32 %v91, 0.0
    %v228 = vmax.f32 %v92, 0.0
    %v229 = vmax.f32 %v93, 0.0
    %v230 = vmax.f32 %v94, 0.0
    %v231 = vmax.f32 %v95, 0.0
    %v232 = vmax.f32 %v96, 0.0
    %v233 = vmax.f32 %v97, 0.0
    %v234 = vmax.f32 %v98, 0.0
    %v235 = vmax.f32 %v99, 0.0
    %v236 = vmax.f32 %v100, 0.0
    %v237 = vmax.f32 %v101, 0.0
    %v238 = vmax.f32 %v102, 0.0
    %v239 = vmax.f32 %v103, 0.0
    %v240 = vmax.f32 %v104, 0.0
    %v241 = vmax.f32 %v105, 0.0
    %v242 = vmax.f32 %v106, 0.0
    %v243 = vmax.f32 %v107, 0.0
    %v244 = vmax.f32 %v108, 0.0
    %v245 = vmax.f32 %v109, 0.0
    %v246 = vmax.f32 %v110, 0.0
    %v247 = vmax.f32 %v111, 0.0
    %v248 = vmax.f32 %v112, 0.0
    %v249 = vmax.f32 %v113, 0.0
    %v250 = vmax.f32 %v114, 0.0
    %v251 = vmax.f32 %v115, 0.0
    %v252 = vmax.f32 %v116, 0.0
    %v253 = vmax.f32 %v117, 0.0
    %v254 = vmax.f32 %v118, 0.0
    %v255 = vmax.f32 %v119, 0.0
    %v256 = vmax.f32 %v120, 0.0
    %v257 = vmax.f32 %v121, 0.0
    %v258 = vmax.f32 %v122, 0.0
    %v259 = vmax.f32 %v123, 0.0
    %v260 = vmax.f32 %v124, 0.0
    %v261 = vmax.f32 %v125, 0.0
    %v262 = vmax.f32 %v126, 0.0
    %v263 = vmax.f32 %v127, 0.0
    %v264 = vmax.f32 %v128, 0.0
    %v265 = vmax.f32 %v129, 0.0
    %v266 = vmax.f32 %v130, 0.0
    %v267 = vmax.f32 %v131, 0.0
    %v268 = vmax.f32 %v132, 0.0
    %v269 = vmax.f32 %v133, 0.0
    %v270 = vmax.f32 %v134, 0.0
    %v271 = vmax.f32 %v135, 0.0
    %v272 = vmax.f32 %v136, 0.0
    %v273 = vmax.f32 %v137, 0.0
    %v274 = vmax.f32 %v138, 0.0
    %v275 = vmax.f32 %v139, 0.0
    %v276 = vmax.f32 %v140, 0.0
    %v277 = vmax.f32 %v141, 0.0
    %v278 = vmax.f32 %v142, 0.0
    %v279 = vmax.f32 %v143, 0.0
    %v280 = vmax.f32 %v144, 0.0
    %v281 = vmax.f32 %v145, 0.0
    %v282 = vmax.f32 %v146, 0.0
    %v283 = vmax.f32 %v147, 0.0
    %v284 = vmax.f32 %v148, 0.0
    %v285 = vmax.f32 %v149, 0.0
    %v286 = vmax.f32 %v150, 0.0
    %v287 = vmax.f32 %v151, 0.0
    %v288 = vmax.f32 %v152, 0.0
    %v289 = vmax.f32 %v153, 0.0
    %v290 = vmax.f32 %v154, 0.0
    %v291 = vmax.f32 %v155, 0.0
    %v292 = vmax.f32 %v156, 0.0
    %v293 = vmax.f32 %v157, 0.0
    %v294 = vmax.f32 %v158, 0.0
    %v295 = vand.u32 2147483647, %v23
    %v296 = vand.u32 2147483647, %v24
    %v297 = vand.u32 2147483647, %v25
    %v298 = vand.u32 2147483647, %v26
    %v299 = vand.u32 2147483647, %v27
    %v300 = vand.u32 2147483647, %v28
    %v301 = vand.u32 2147483647, %v29
    %v302 = vand.u32 2147483647, %v30
    %v303 = vand.u32 2147483647, %v31
    %v304 = vand.u32 2147483647, %v32
    %v305 = vand.u32 2147483647, %v33
    %v306 = vand.u32 2147483647, %v34
    %v307 = vand.u32 2147483647, %v35
    %v308 = vand.u32 2147483647, %v36
    %v309 = vand.u32 2147483647, %v37
    %v310 = vand.u32 2147483647, %v38
    %v311 = vand.u32 2147483647, %v39
    %v312 = vand.u32 2147483647, %v40
    %v313 = vand.u32 2147483647, %v41
    %v314 = vand.u32 2147483647, %v42
    %v315 = vand.u32 2147483647, %v43
    %v316 = vand.u32 2147483647, %v44
    %v317 = vand.u32 2147483647, %v45
    %v318 = vand.u32 2147483647, %v46
    %v319 = vand.u32 2147483647, %v47
    %v320 = vand.u32 2147483647, %v48
    %v321 = vand.u32 2147483647, %v49
    %v322 = vand.u32 2147483647, %v50
    %v323 = vand.u32 2147483647, %v51
    %v324 = vand.u32 2147483647, %v52
    %v325 = vand.u32 2147483647, %v53
    %v326 = vand.u32 2147483647, %v54
    %v327 = vand.u32 2147483647, %v55
    %v328 = vand.u32 2147483647, %v56
    %v329 = vand.u32 2147483647, %v57
    %v330 = vand.u32 2147483647, %v58
    %v331 = vand.u32 2147483647, %v59
    %v332 = vand.u32 2147483647, %v60
    %v333 = vand.u32 2147483647, %v61
    %v334 = vand.u32 2147483647, %v62
    %v335 = vand.u32 2147483647, %v63
    %v336 = vand.u32 2147483647, %v64
    %v337 = vand.u32 2147483647, %v65
    %v338 = vand.u32 2147483647, %v66
    %v339 = vand.u32 2147483647, %v67
    %v340 = vand.u32 2147483647, %v68
    %v341 = vand.u32 2147483647, %v69
    %v342 = vand.u32 2147483647, %v70
    %v343 = vand.u32 2147483647, %v71
    %v344 = vand.u32 2147483647, %v72
    %v345 = vand.u32 2147483647, %v73
    %v346 = vand.u32 2147483647, %v74
    %v347 = vand.u32 2147483647, %v75
    %v348 = vand.u32 2147483647, %v76
    %v349 = vand.u32 2147483647, %v77
    %v350 = vand.u32 2147483647, %v78
    %v351 = vand.u32 2147483647, %v79
    %v352 = vand.u32 2147483647, %v80
    %v353 = vand.u32 2147483647, %v81
    %v354 = vand.u32 2147483647, %v82
    %v355 = vand.u32 2147483647, %v83
    %v356 = vand.u32 2147483647, %v84
    %v357 = vand.u32 2147483647, %v85
    %v358 = vand.u32 2147483647, %v86
    %v359 = vand.u32 2147483647, %v87
    %v360 = vand.u32 2147483647, %v88
    %v361 = vand.u32 2147483647, %v89
    %v362 = vand.u32 2147483647, %v90
    %v363 = vand.u32 2147483647, %v91
    %v364 = vand.u32 2147483647, %v92
    %v365 = vand.u32 2147483647, %v93
    %v366 = vand.u32 2147483647, %v94
    %v367 = vand.u32 2147483647, %v95
    %v368 = vand.u32 2147483647, %v96
    %v369 = vand.u32 2147483647, %v97
    %v370 = vand.u32 2147483647, %v98
    %v371 = vand.u32 2147483647, %v99
    %v372 = vand.u32 2147483647, %v100
    %v373 = vand.u32 2147483647, %v101
    %v374 = vand.u32 2147483647, %v102
    %v375 = vand.u32 2147483647, %v103
    %v376 = vand.u32 2147483647, %v104
    %v377 = vand.u32 2147483647, %v105
    %v378 = vand.u32 2147483647, %v106
    %v379 = vand.u32 2147483647, %v107
    %v380 = vand.u32 2147483647, %v108
    %v381 = vand.u32 2147483647, %v109
    %v382 = vand.u32 2147483647, %v110
    %v383 = vand.u32 2147483647, %v111
    %v384 = vand.u32 2147483647, %v112
    %v385 = vand.u32 2147483647, %v113
    %v386 = vand.u32 2147483647, %v114
    %v387 = vand.u32 2147483647, %v115
    %v388 = vand.u32 2147483647, %v116
    %v389 = vand.u32 2147483647, %v117
    %v390 = vand.u32 2147483647, %v118
    %v391 = vand.u32 2147483647, %v119
    %v392 = vand.u32 2147483647, %v120
    %v393 = vand.u32 2147483647, %v121
    %v394 = vand.u32 2147483647, %v122
    %v395 = vand.u32 2147483647, %v123
    %v396 = vand.u32 2147483647, %v124
    %v397 = vand.u32 2147483647, %v125
    %v398 = vand.u32 2147483647, %v126
    %v399 = vand.u32 2147483647, %v127
    %v400 = vand.u32 2147483647, %v128
    %v401 = vand.u32 2147483647, %v129
    %v402 = vand.u32 2147483647, %v130
    %v403 = vand.u32 2147483647, %v131
    %v404 = vand.u32 2147483647, %v132
    %v405 = vand.u32 2147483647, %v133
    %v406 = vand.u32 2147483647, %v134
    %v407 = vand.u32 2147483647, %v135
    %v408 = vand.u32 2147483647, %v136
    %v409 = vand.u32 2147483647, %v137
    %v410 = vand.u32 2147483647, %v138
    %v411 = vand.u32 2147483647, %v139
    %v412 = vand.u32 2147483647, %v140
    %v413 = vand.u32 2147483647, %v141
    %v414 = vand.u32 2147483647, %v142
    %v415 = vand.u32 2147483647, %v143
    %v416 = vand.u32 2147483647, %v144
    %v417 = vand.u32 2147483647, %v145
    %v418 = vand.u32 2147483647, %v146
    %v419 = vand.u32 2147483647, %v147
    %v420 = vand.u32 2147483647, %v148
    %v421 = vand.u32 2147483647, %v149
    %v422 = vand.u32 2147483647, %v150
    %v423 = vand.u32 2147483647, %v151
    %v424 = vand.u32 2147483647, %v152
    %v425 = vand.u32 2147483647, %v153
    %v426 = vand.u32 2147483647, %v154
    %v427 = vand.u32 2147483647, %v155
    %v428 = vand.u32 2147483647, %v156
    %v429 = vand.u32 2147483647, %v157
    %v430 = vand.u32 2147483647, %v158
    %v431 = vsub.f32 0.0, %v295
    %v432 = vsub.f32 0.0, %v296
    %v433 = vsub.f32 0.0, %v297
    %v434 = vsub.f32 0.0, %v298
    %v435 = vsub.f32 0.0, %v299
    %v436 = vsub.f32 0.0, %v300
    %v437 = vsub.f32 0.0, %v301
    %v438 = vsub.f32 0.0, %v302
    %v439 = vsub.f32 0.0, %v303
    %v440 = vsub.f32 0.0, %v304
    %v441 = vsub.f32 0.0, %v305
    %v442 = vsub.f32 0.0, %v306
    %v443 = vsub.f32 0.0, %v307
    %v444 = vsub.f32 0.0, %v308
    %v445 = vsub.f32 0.0, %v309
    %v446 = vsub.f32 0.0, %v310
    %v447 = vsub.f32 0.0, %v311
    %v448 = vsub.f32 0.0, %v312
    %v449 = vsub.f32 0.0, %v313
    %v450 = vsub.f32 0.0, %v314
    %v451 = vsub.f32 0.0, %v315
    %v452 = vsub.f32 0.0, %v316
    %v453 = vsub.f32 0.0, %v317
    %v454 = vsub.f32 0.0, %v318
    %v455 = vsub.f32 0.0, %v319
    %v456 = vsub.f32 0.0, %v320
    %v457 = vsub.f32 0.0, %v321
    %v458 = vsub.f32 0.0, %v322
    %v459 = vsub.f32 0.0, %v323
    %v460 = vsub.f32 0.0, %v324
    %v461 = vsub.f32 0.0, %v325
    %v462 = vsub.f32 0.0, %v326
    %v463 = vsub.f32 0.0, %v327
    %v464 = vsub.f32 0.0, %v328
    %v465 = vsub.f32 0.0, %v329
    %v466 = vsub.f32 0.0, %v330
    %v467 = vsub.f32 0.0, %v331
    %v468 = vsub.f32 0.0, %v332
    %v469 = vsub.f32 0.0, %v333
    %v470 = vsub.f32 0.0, %v334
    %v471 = vsub.f32 0.0, %v335
    %v472 = vsub.f32 0.0, %v336
    %v473 = vsub.f32 0.0, %v337
    %v474 = vsub.f32 0.0, %v338
    %v475 = vsub.f32 0.0, %v339
    %v476 = vsub.f32 0.0, %v340
    %v477 = vsub.f32 0.0, %v341
    %v478 = vsub.f32 0.0, %v342
    %v479 = vsub.f32 0.0, %v343
    %v480 = vsub.f32 0.0, %v344
    %v481 = vsub.f32 0.0, %v345
    %v482 = vsub.f32 0.0, %v346
    %v483 = vsub.f32 0.0, %v347
    %v484 = vsub.f32 0.0, %v348
    %v485 = vsub.f32 0.0, %v349
    %v486 = vsub.f32 0.0, %v350
    %v487 = vsub.f32 0.0, %v351
    %v488 = vsub.f32 0.0, %v352
    %v489 = vsub.f32 0.0, %v353
    %v490 = vsub.f32 0.0, %v354
    %v491 = vsub.f32 0.0, %v355
    %v492 = vsub.f32 0.0, %v356
    %v493 = vsub.f32 0.0, %v357
    %v494 = vsub.f32 0.0, %v358
    %v495 = vsub.f32 0.0, %v359
    %v496 = vsub.f32 0.0, %v360
    %v497 = vsub.f32 0.0, %v361
    %v498 = vsub.f32 0.0, %v362
    %v499 = vsub.f32 0.0, %v363
    %v500 = vsub.f32 0.0, %v364
    %v501 = vsub.f32 0.0, %v365
    %v502 = vsub.f32 0.0, %v366
    %v503 = vsub.f32 0.0, %v367
    %v504 = vsub.f32 0.0, %v368
    %v505 = vsub.f32 0.0, %v369
    %v506 = vsub.f32 0.0, %v370
    %v507 = vsub.f32 0.0, %v371
    %v508 = vsub.f32 0.0, %v372
    %v509 = vsub.f32 0.0, %v373
    %v510 = vsub.f32 0.0, %v374
    %v511 = vsub.f32 0.0, %v375
    %v512 = vsub.f32 0.0, %v376
    %v513 = vsub.f32 0.0, %v377
    %v514 = vsub.f32 0.0, %v378
    %v515 = vsub.f32 0.0, %v379
    %v516 = vsub.f32 0.0, %v380
    %v517 = vsub.f32 0.0, %v381
    %v518 = vsub.f32 0.0, %v382
    %v519 = vsub.f32 0.0, %v383
    %v520 = vsub.f32 0.0, %v384
    %v521 = vsub.f32 0.0, %v385
    %v522 = vsub.f32 0.0, %v386
    %v523 = vsub.f32 0.0, %v387
    %v524 = vsub.f32 0.0, %v388
    %v525 = vsub.f32 0.0, %v389
    %v526 = vsub.f32 0.0, %v390
    %v527 = vsub.f32 0.0, %v391
    %v528 = vsub.f32 0.0, %v392
    %v529 = vsub.f32 0.0, %v393
    %v530 = vsub.f32 0.0, %v394
    %v531 = vsub.f32 0.0, %v395
    %v532 = vsub.f32 0.0, %v396
    %v533 = vsub.f32 0.0, %v397
    %v534 = vsub.f32 0.0, %v398
    %v535 = vsub.f32 0.0, %v399
    %v536 = vsub.f32 0.0, %v400
    %v537 = vsub.f32 0.0, %v401
    %v538 = vsub.f32 0.0, %v402
    %v539 = vsub.f32 0.0, %v403
    %v540 = vsub.f32 0.0, %v404
    %v541 = vsub.f32 0.0, %v405
    %v542 = vsub.f32 0.0, %v406
    %v543 = vsub.f32 0.0, %v407
    %v544 = vsub.f32 0.0, %v408
    %v545 = vsub.f32 0.0, %v409
    %v546 = vsub.f32 0.0, %v410
    %v547 = vsub.f32 0.0, %v411
    %v548 = vsub.f32 0.0, %v412
    %v549 = vsub.f32 0.0, %v413
    %v550 = vsub.f32 0.0, %v414
    %v551 = vsub.f32 0.0, %v415
    %v552 = vsub.f32 0.0, %v416
    %v553 = vsub.f32 0.0, %v417
    %v554 = vsub.f32 0.0, %v418
    %v555 = vsub.f32 0.0, %v419
    %v556 = vsub.f32 0.0, %v420
    %v557 = vsub.f32 0.0, %v421
    %v558 = vsub.f32 0.0, %v422
    %v559 = vsub.f32 0.0, %v423
    %v560 = vsub.f32 0.0, %v424
    %v561 = vsub.f32 0.0, %v425
    %v562 = vsub.f32 0.0, %v426
    %v563 = vsub.f32 0.0, %v427
    %v564 = vsub.f32 0.0, %v428
    %v565 = vsub.f32 0.0, %v429
    %v566 = vsub.f32 0.0, %v430
    %v567 = vmul.f32 %v431, 1.442695
    %v568 = vpow.pop %v567
    %v569 = vmul.f32 %v432, 1.442695
    %v570 = vpow.pop %v569
    %v571 = vmul.f32 %v433, 1.442695
    %v572 = vpow.pop %v571
    %v573 = vmul.f32 %v434, 1.442695
    %v574 = vpow.pop %v573
    %v575 = vmul.f32 %v435, 1.442695
    %v576 = vpow.pop %v575
    %v577 = vmul.f32 %v436, 1.442695
    %v578 = vpow.pop %v577
    %v579 = vmul.f32 %v437, 1.442695
    %v580 = vpow.pop %v579
    %v581 = vmul.f32 %v438, 1.442695
    %v582 = vpow.pop %v581
    %v583 = vmul.f32 %v439, 1.442695
    %v584 = vpow.pop %v583
    %v585 = vmul.f32 %v440, 1.442695
    %v586 = vpow.pop %v585
    %v587 = vmul.f32 %v441, 1.442695
    %v588 = vpow.pop %v587
    %v589 = vmul.f32 %v442, 1.442695
    %v590 = vpow.pop %v589
    %v591 = vmul.f32 %v443, 1.442695
    %v592 = vpow.pop %v591
    %v593 = vmul.f32 %v444, 1.442695
    %v594 = vpow.pop %v593
    %v595 = vmul.f32 %v445, 1.442695
    %v596 = vpow.pop %v595
    %v597 = vmul.f32 %v446, 1.442695
    %v598 = vpow.pop %v597
    %v599 = vmul.f32 %v447, 1.442695
    %v600 = vpow.pop %v599
    %v601 = vmul.f32 %v448, 1.442695
    %v602 = vpow.pop %v601
    %v603 = vmul.f32 %v449, 1.442695
    %v604 = vpow.pop %v603
    %v605 = vmul.f32 %v450, 1.442695
    %v606 = vpow.pop %v605
    %v607 = vmul.f32 %v451, 1.442695
    %v608 = vpow.pop %v607
    %v609 = vmul.f32 %v452, 1.442695
    %v610 = vpow.pop %v609
    %v611 = vmul.f32 %v453, 1.442695
    %v612 = vpow.pop %v611
    %v613 = vmul.f32 %v454, 1.442695
    %v614 = vpow.pop %v613
    %v615 = vmul.f32 %v455, 1.442695
    %v616 = vpow.pop %v615
    %v617 = vmul.f32 %v456, 1.442695
    %v618 = vpow.pop %v617
    %v619 = vmul.f32 %v457, 1.442695
    %v620 = vpow.pop %v619
    %v621 = vmul.f32 %v458, 1.442695
    %v622 = vpow.pop %v621
    %v623 = vmul.f32 %v459, 1.442695
    %v624 = vpow.pop %v623
    %v625 = vmul.f32 %v460, 1.442695
    %v626 = vpow.pop %v625
    %v627 = vmul.f32 %v461, 1.442695
    %v628 = vpow.pop %v627
    %v629 = vmul.f32 %v462, 1.442695
    %v630 = vpow.pop %v629
    %v631 = vmul.f32 %v463, 1.442695
    %v632 = vpow.pop %v631
    %v633 = vmul.f32 %v464, 1.442695
    %v634 = vpow.pop %v633
    %v635 = vmul.f32 %v465, 1.442695
    %v636 = vpow.pop %v635
    %v637 = vmul.f32 %v466, 1.442695
    %v638 = vpow.pop %v637
    %v639 = vmul.f32 %v467, 1.442695
    %v640 = vpow.pop %v639
    %v641 = vmul.f32 %v468, 1.442695
    %v642 = vpow.pop %v641
    %v643 = vmul.f32 %v469, 1.442695
    %v644 = vpow.pop %v643
    %v645 = vmul.f32 %v470, 1.442695
    %v646 = vpow.pop %v645
    %v647 = vmul.f32 %v471, 1.442695
    %v648 = vpow.pop %v647
    %v649 = vmul.f32 %v472, 1.442695
    %v650 = vpow.pop %v649
    %v651 = vmul.f32 %v473, 1.442695
    %v652 = vpow.pop %v651
    %v653 = vmul.f32 %v474, 1.442695
    %v654 = vpow.pop %v653
    %v655 = vmul.f32 %v475, 1.442695
    %v656 = vpow.pop %v655
    %v657 = vmul.f32 %v476, 1.442695
    %v658 = vpow.pop %v657
    %v659 = vmul.f32 %v477, 1.442695
    %v660 = vpow.pop %v659
    %v661 = vmul.f32 %v478, 1.442695
    %v662 = vpow.pop %v661
    %v663 = vmul.f32 %v479, 1.442695
    %v664 = vpow.pop %v663
    %v665 = vmul.f32 %v480, 1.442695
    %v666 = vpow.pop %v665
    %v667 = vmul.f32 %v481, 1.442695
    %v668 = vpow.pop %v667
    %v669 = vmul.f32 %v482, 1.442695
    %v670 = vpow.pop %v669
    %v671 = vmul.f32 %v483, 1.442695
    %v672 = vpow.pop %v671
    %v673 = vmul.f32 %v484, 1.442695
    %v674 = vpow.pop %v673
    %v675 = vmul.f32 %v485, 1.442695
    %v676 = vpow.pop %v675
    %v677 = vmul.f32 %v486, 1.442695
    %v678 = vpow.pop %v677
    %v679 = vmul.f32 %v487, 1.442695
    %v680 = vpow.pop %v679
    %v681 = vmul.f32 %v488, 1.442695
    %v682 = vpow.pop %v681
    %v683 = vmul.f32 %v489, 1.442695
    %v684 = vpow.pop %v683
    %v685 = vmul.f32 %v490, 1.442695
    %v686 = vpow.pop %v685
    %v687 = vmul.f32 %v491, 1.442695
    %v688 = vpow.pop %v687
    %v689 = vmul.f32 %v492, 1.442695
    %v690 = vpow.pop %v689
    %v691 = vmul.f32 %v493, 1.442695
    %v692 = vpow.pop %v691
    %v693 = vmul.f32 %v494, 1.442695
    %v694 = vpow.pop %v693
    %v695 = vmul.f32 %v495, 1.442695
    %v696 = vpow.pop %v695
    %v697 = vmul.f32 %v496, 1.442695
    %v698 = vpow.pop %v697
    %v699 = vmul.f32 %v497, 1.442695
    %v700 = vpow.pop %v699
    %v701 = vmul.f32 %v498, 1.442695
    %v702 = vpow.pop %v701
    %v703 = vmul.f32 %v499, 1.442695
    %v704 = vpow.pop %v703
    %v705 = vmul.f32 %v500, 1.442695
    %v706 = vpow.pop %v705
    %v707 = vmul.f32 %v501, 1.442695
    %v708 = vpow.pop %v707
    %v709 = vmul.f32 %v502, 1.442695
    %v710 = vpow.pop %v709
    %v711 = vmul.f32 %v503, 1.442695
    %v712 = vpow.pop %v711
    %v713 = vmul.f32 %v504, 1.442695
    %v714 = vpow.pop %v713
    %v715 = vmul.f32 %v505, 1.442695
    %v716 = vpow.pop %v715
    %v717 = vmul.f32 %v506, 1.442695
    %v718 = vpow.pop %v717
    %v719 = vmul.f32 %v507, 1.442695
    %v720 = vpow.pop %v719
    %v721 = vmul.f32 %v508, 1.442695
    %v722 = vpow.pop %v721
    %v723 = vmul.f32 %v509, 1.442695
    %v724 = vpow.pop %v723
    %v725 = vmul.f32 %v510, 1.442695
    %v726 = vpow.pop %v725
    %v727 = vmul.f32 %v511, 1.442695
    %v728 = vpow.pop %v727
    %v729 = vmul.f32 %v512, 1.442695
    %v730 = vpow.pop %v729
    %v731 = vmul.f32 %v513, 1.442695
    %v732 = vpow.pop %v731
    %v733 = vmul.f32 %v514, 1.442695
    %v734 = vpow.pop %v733
    %v735 = vmul.f32 %v515, 1.442695
    %v736 = vpow.pop %v735
    %v737 = vmul.f32 %v516, 1.442695
    %v738 = vpow.pop %v737
    %v739 = vmul.f32 %v517, 1.442695
    %v740 = vpow.pop %v739
    %v741 = vmul.f32 %v518, 1.442695
    %v742 = vpow.pop %v741
    %v743 = vmul.f32 %v519, 1.442695
    %v744 = vpow.pop %v743
    %v745 = vmul.f32 %v520, 1.442695
    %v746 = vpow.pop %v745
    %v747 = vmul.f32 %v521, 1.442695
    %v748 = vpow.pop %v747
    %v749 = vmul.f32 %v522, 1.442695
    %v750 = vpow.pop %v749
    %v751 = vmul.f32 %v523, 1.442695
    %v752 = vpow.pop %v751
    %v753 = vmul.f32 %v524, 1.442695
    %v754 = vpow.pop %v753
    %v755 = vmul.f32 %v525, 1.442695
    %v756 = vpow.pop %v755
    %v757 = vmul.f32 %v526, 1.442695
    %v758 = vpow.pop %v757
    %v759 = vmul.f32 %v527, 1.442695
    %v760 = vpow.pop %v759
    %v761 = vmul.f32 %v528, 1.442695
    %v762 = vpow.pop %v761
    %v763 = vmul.f32 %v529, 1.442695
    %v764 = vpow.pop %v763
    %v765 = vmul.f32 %v530, 1.442695
    %v766 = vpow.pop %v765
    %v767 = vmul.f32 %v531, 1.442695
    %v768 = vpow.pop %v767
    %v769 = vmul.f32 %v532, 1.442695
    %v770 = vpow.pop %v769
    %v771 = vmul.f32 %v533, 1.442695
    %v772 = vpow.pop %v771
    %v773 = vmul.f32 %v534, 1.442695
    %v774 = vpow.pop %v773
    %v775 = vmul.f32 %v535, 1.442695
    %v776 = vpow.pop %v775
    %v777 = vmul.f32 %v536, 1.442695
    %v778 = vpow.pop %v777
    %v779 = vmul.f32 %v537, 1.442695
    %v780 = vpow.pop %v779
    %v781 = vmul.f32 %v538, 1.442695
    %v782 = vpow.pop %v781
    %v783 = vmul.f32 %v539, 1.442695
    %v784 = vpow.pop %v783
    %v785 = vmul.f32 %v540, 1.442695
    %v786 = vpow.pop %v785
    %v787 = vmul.f32 %v541, 1.442695
    %v788 = vpow.pop %v787
    %v789 = vmul.f32 %v542, 1.442695
    %v790 = vpow.pop %v789
    %v791 = vmul.f32 %v543, 1.442695
    %v792 = vpow.pop %v791
    %v793 = vmul.f32 %v544, 1.442695
    %v794 = vpow.pop %v793
    %v795 = vmul.f32 %v545, 1.442695
    %v796 = vpow.pop %v795
    %v797 = vmul.f32 %v546, 1.442695
    %v798 = vpow.pop %v797
    %v799 = vmul.f32 %v547, 1.442695
    %v800 = vpow.pop %v799
    %v801 = vmul.f32 %v548, 1.442695
    %v802 = vpow.pop %v801
    %v803 = vmul.f32 %v549, 1.442695
    %v804 = vpow.pop %v803
    %v805 = vmul.f32 %v550, 1.442695
    %v806 = vpow.pop %v805
    %v807 = vmul.f32 %v551, 1.442695
    %v808 = vpow.pop %v807
    %v809 = vmul.f32 %v552, 1.442695
    %v810 = vpow.pop %v809
    %v811 = vmul.f32 %v553, 1.442695
    %v812 = vpow.pop %v811
    %v813 = vmul.f32 %v554, 1.442695
    %v814 = vpow.pop %v813
    %v815 = vmul.f32 %v555, 1.442695
    %v816 = vpow.pop %v815
    %v817 = vmul.f32 %v556, 1.442695
    %v818 = vpow.pop %v817
    %v819 = vmul.f32 %v557, 1.442695
    %v820 = vpow.pop %v819
    %v821 = vmul.f32 %v558, 1.442695
    %v822 = vpow.pop %v821
    %v823 = vmul.f32 %v559, 1.442695
    %v824 = vpow.pop %v823
    %v825 = vmul.f32 %v560, 1.442695
    %v826 = vpow.pop %v825
    %v827 = vmul.f32 %v561, 1.442695
    %v828 = vpow.pop %v827
    %v829 = vmul.f32 %v562, 1.442695
    %v830 = vpow.pop %v829
    %v831 = vmul.f32 %v563, 1.442695
    %v832 = vpow.pop %v831
    %v833 = vmul.f32 %v564, 1.442695
    %v834 = vpow.pop %v833
    %v835 = vmul.f32 %v565, 1.442695
    %v836 = vpow.pop %v835
    %v837 = vmul.f32 %v566, 1.442695
    %v838 = vpow.pop %v837
    %v839 = vadd.f32 %v568, 1.0
    %v840 = vlog2.pop %v839
    %v841 = vmul.f32 %v840, 0.6931472
    %v842 = vmul.f32 -0.5, %v568
    %v843 = vadd.f32 %v842, 1.0
    %v844 = vmul.f32 %v843, %v568
    %v845 = vand.u32 2147483647, %v568
    %vm846 = vcmp.lt.f32.partialorder %v845, 0.0004427343
    %v847 = vsel %vm846, %v844, %v841
    %v848 = vadd.f32 %v570, 1.0
    %v849 = vlog2.pop %v848
    %v850 = vmul.f32 %v849, 0.6931472
    %v851 = vmul.f32 -0.5, %v570
    %v852 = vadd.f32 %v851, 1.0
    %v853 = vmul.f32 %v852, %v570
    %v854 = vand.u32 2147483647, %v570
    %vm855 = vcmp.lt.f32.partialorder %v854, 0.0004427343
    %v856 = vsel %vm855, %v853, %v850
    %v857 = vadd.f32 %v572, 1.0
    %v858 = vlog2.pop %v857
    %v859 = vmul.f32 %v858, 0.6931472
    %v860 = vmul.f32 -0.5, %v572
    %v861 = vadd.f32 %v860, 1.0
    %v862 = vmul.f32 %v861, %v572
    %v863 = vand.u32 2147483647, %v572
    %vm864 = vcmp.lt.f32.partialorder %v863, 0.0004427343
    %v865 = vsel %vm864, %v862, %v859
    %v866 = vadd.f32 %v574, 1.0
    %v867 = vlog2.pop %v866
    %v868 = vmul.f32 %v867, 0.6931472
    %v869 = vmul.f32 -0.5, %v574
    %v870 = vadd.f32 %v869, 1.0
    %v871 = vmul.f32 %v870, %v574
    %v872 = vand.u32 2147483647, %v574
    %vm873 = vcmp.lt.f32.partialorder %v872, 0.0004427343
    %v874 = vsel %vm873, %v871, %v868
    %v875 = vadd.f32 %v576, 1.0
    %v876 = vlog2.pop %v875
    %v877 = vmul.f32 %v876, 0.6931472
    %v878 = vmul.f32 -0.5, %v576
    %v879 = vadd.f32 %v878, 1.0
    %v880 = vmul.f32 %v879, %v576
    %v881 = vand.u32 2147483647, %v576
    %vm882 = vcmp.lt.f32.partialorder %v881, 0.0004427343
    %v883 = vsel %vm882, %v880, %v877
    %v884 = vadd.f32 %v578, 1.0
    %v885 = vlog2.pop %v884
    %v886 = vmul.f32 %v885, 0.6931472
    %v887 = vmul.f32 -0.5, %v578
    %v888 = vadd.f32 %v887, 1.0
    %v889 = vmul.f32 %v888, %v578
    %v890 = vand.u32 2147483647, %v578
    %vm891 = vcmp.lt.f32.partialorder %v890, 0.0004427343
    %v892 = vsel %vm891, %v889, %v886
    %v893 = vadd.f32 %v580, 1.0
    %v894 = vlog2.pop %v893
    %v895 = vmul.f32 %v894, 0.6931472
    %v896 = vmul.f32 -0.5, %v580
    %v897 = vadd.f32 %v896, 1.0
    %v898 = vmul.f32 %v897, %v580
    %v899 = vand.u32 2147483647, %v580
    %vm900 = vcmp.lt.f32.partialorder %v899, 0.0004427343
    %v901 = vsel %vm900, %v898, %v895
    %v902 = vadd.f32 %v582, 1.0
    %v903 = vlog2.pop %v902
    %v904 = vmul.f32 %v903, 0.6931472
    %v905 = vmul.f32 -0.5, %v582
    %v906 = vadd.f32 %v905, 1.0
    %v907 = vmul.f32 %v906, %v582
    %v908 = vand.u32 2147483647, %v582
    %vm909 = vcmp.lt.f32.partialorder %v908, 0.0004427343
    %v910 = vsel %vm909, %v907, %v904
    %v911 = vadd.f32 %v584, 1.0
    %v912 = vlog2.pop %v911
    %v913 = vmul.f32 %v912, 0.6931472
    %v914 = vmul.f32 -0.5, %v584
    %v915 = vadd.f32 %v914, 1.0
    %v916 = vmul.f32 %v915, %v584
    %v917 = vand.u32 2147483647, %v584
    %vm918 = vcmp.lt.f32.partialorder %v917, 0.0004427343
    %v919 = vsel %vm918, %v916, %v913
    %v920 = vadd.f32 %v586, 1.0
    %v921 = vlog2.pop %v920
    %v922 = vmul.f32 %v921, 0.6931472
    %v923 = vmul.f32 -0.5, %v586
    %v924 = vadd.f32 %v923, 1.0
    %v925 = vmul.f32 %v924, %v586
    %v926 = vand.u32 2147483647, %v586
    %vm927 = vcmp.lt.f32.partialorder %v926, 0.0004427343
    %v928 = vsel %vm927, %v925, %v922
    %v929 = vadd.f32 %v588, 1.0
    %v930 = vlog2.pop %v929
    %v931 = vmul.f32 %v930, 0.6931472
    %v932 = vmul.f32 -0.5, %v588
    %v933 = vadd.f32 %v932, 1.0
    %v934 = vmul.f32 %v933, %v588
    %v935 = vand.u32 2147483647, %v588
    %vm936 = vcmp.lt.f32.partialorder %v935, 0.0004427343
    %v937 = vsel %vm936, %v934, %v931
    %v938 = vadd.f32 %v590, 1.0
    %v939 = vlog2.pop %v938
    %v940 = vmul.f32 %v939, 0.6931472
    %v941 = vmul.f32 -0.5, %v590
    %v942 = vadd.f32 %v941, 1.0
    %v943 = vmul.f32 %v942, %v590
    %v944 = vand.u32 2147483647, %v590
    %vm945 = vcmp.lt.f32.partialorder %v944, 0.0004427343
    %v946 = vsel %vm945, %v943, %v940
    %v947 = vadd.f32 %v592, 1.0
    %v948 = vlog2.pop %v947
    %v949 = vmul.f32 %v948, 0.6931472
    %v950 = vmul.f32 -0.5, %v592
    %v951 = vadd.f32 %v950, 1.0
    %v952 = vmul.f32 %v951, %v592
    %v953 = vand.u32 2147483647, %v592
    %vm954 = vcmp.lt.f32.partialorder %v953, 0.0004427343
    %v955 = vsel %vm954, %v952, %v949
    %v956 = vadd.f32 %v594, 1.0
    %v957 = vlog2.pop %v956
    %v958 = vmul.f32 %v957, 0.6931472
    %v959 = vmul.f32 -0.5, %v594
    %v960 = vadd.f32 %v959, 1.0
    %v961 = vmul.f32 %v960, %v594
    %v962 = vand.u32 2147483647, %v594
    %vm963 = vcmp.lt.f32.partialorder %v962, 0.0004427343
    %v964 = vsel %vm963, %v961, %v958
    %v965 = vadd.f32 %v596, 1.0
    %v966 = vlog2.pop %v965
    %v967 = vmul.f32 %v966, 0.6931472
    %v968 = vmul.f32 -0.5, %v596
    %v969 = vadd.f32 %v968, 1.0
    %v970 = vmul.f32 %v969, %v596
    %v971 = vand.u32 2147483647, %v596
    %vm972 = vcmp.lt.f32.partialorder %v971, 0.0004427343
    %v973 = vsel %vm972, %v970, %v967
    %v974 = vadd.f32 %v598, 1.0
    %v975 = vlog2.pop %v974
    %v976 = vmul.f32 %v975, 0.6931472
    %v977 = vmul.f32 -0.5, %v598
    %v978 = vadd.f32 %v977, 1.0
    %v979 = vmul.f32 %v978, %v598
    %v980 = vand.u32 2147483647, %v598
    %vm981 = vcmp.lt.f32.partialorder %v980, 0.0004427343
    %v982 = vsel %vm981, %v979, %v976
    %v983 = vadd.f32 %v600, 1.0
    %v984 = vlog2.pop %v983
    %v985 = vmul.f32 %v984, 0.6931472
    %v986 = vmul.f32 -0.5, %v600
    %v987 = vadd.f32 %v986, 1.0
    %v988 = vmul.f32 %v987, %v600
    %v989 = vand.u32 2147483647, %v600
    %vm990 = vcmp.lt.f32.partialorder %v989, 0.0004427343
    %v991 = vsel %vm990, %v988, %v985
    %v992 = vadd.f32 %v602, 1.0
    %v993 = vlog2.pop %v992
    %v994 = vmul.f32 %v993, 0.6931472
    %v995 = vmul.f32 -0.5, %v602
    %v996 = vadd.f32 %v995, 1.0
    %v997 = vmul.f32 %v996, %v602
    %v998 = vand.u32 2147483647, %v602
    %vm999 = vcmp.lt.f32.partialorder %v998, 0.0004427343
    %v1000 = vsel %vm999, %v997, %v994
    %v1001 = vadd.f32 %v604, 1.0
    %v1002 = vlog2.pop %v1001
    %v1003 = vmul.f32 %v1002, 0.6931472
    %v1004 = vmul.f32 -0.5, %v604
    %v1005 = vadd.f32 %v1004, 1.0
    %v1006 = vmul.f32 %v1005, %v604
    %v1007 = vand.u32 2147483647, %v604
    %vm1008 = vcmp.lt.f32.partialorder %v1007, 0.0004427343
    %v1009 = vsel %vm1008, %v1006, %v1003
    %v1010 = vadd.f32 %v606, 1.0
    %v1011 = vlog2.pop %v1010
    %v1012 = vmul.f32 %v1011, 0.6931472
    %v1013 = vmul.f32 -0.5, %v606
    %v1014 = vadd.f32 %v1013, 1.0
    %v1015 = vmul.f32 %v1014, %v606
    %v1016 = vand.u32 2147483647, %v606
    %vm1017 = vcmp.lt.f32.partialorder %v1016, 0.0004427343
    %v1018 = vsel %vm1017, %v1015, %v1012
    %v1019 = vadd.f32 %v608, 1.0
    %v1020 = vlog2.pop %v1019
    %v1021 = vmul.f32 %v1020, 0.6931472
    %v1022 = vmul.f32 -0.5, %v608
    %v1023 = vadd.f32 %v1022, 1.0
    %v1024 = vmul.f32 %v1023, %v608
    %v1025 = vand.u32 2147483647, %v608
    %vm1026 = vcmp.lt.f32.partialorder %v1025, 0.0004427343
    %v1027 = vsel %vm1026, %v1024, %v1021
    %v1028 = vadd.f32 %v610, 1.0
    %v1029 = vlog2.pop %v1028
    %v1030 = vmul.f32 %v1029, 0.6931472
    %v1031 = vmul.f32 -0.5, %v610
    %v1032 = vadd.f32 %v1031, 1.0
    %v1033 = vmul.f32 %v1032, %v610
    %v1034 = vand.u32 2147483647, %v610
    %vm1035 = vcmp.lt.f32.partialorder %v1034, 0.0004427343
    %v1036 = vsel %vm1035, %v1033, %v1030
    %v1037 = vadd.f32 %v612, 1.0
    %v1038 = vlog2.pop %v1037
    %v1039 = vmul.f32 %v1038, 0.6931472
    %v1040 = vmul.f32 -0.5, %v612
    %v1041 = vadd.f32 %v1040, 1.0
    %v1042 = vmul.f32 %v1041, %v612
    %v1043 = vand.u32 2147483647, %v612
    %vm1044 = vcmp.lt.f32.partialorder %v1043, 0.0004427343
    %v1045 = vsel %vm1044, %v1042, %v1039
    %v1046 = vadd.f32 %v614, 1.0
    %v1047 = vlog2.pop %v1046
    %v1048 = vmul.f32 %v1047, 0.6931472
    %v1049 = vmul.f32 -0.5, %v614
    %v1050 = vadd.f32 %v1049, 1.0
    %v1051 = vmul.f32 %v1050, %v614
    %v1052 = vand.u32 2147483647, %v614
    %vm1053 = vcmp.lt.f32.partialorder %v1052, 0.0004427343
    %v1054 = vsel %vm1053, %v1051, %v1048
    %v1055 = vadd.f32 %v616, 1.0
    %v1056 = vlog2.pop %v1055
    %v1057 = vmul.f32 %v1056, 0.6931472
    %v1058 = vmul.f32 -0.5, %v616
    %v1059 = vadd.f32 %v1058, 1.0
    %v1060 = vmul.f32 %v1059, %v616
    %v1061 = vand.u32 2147483647, %v616
    %vm1062 = vcmp.lt.f32.partialorder %v1061, 0.0004427343
    %v1063 = vsel %vm1062, %v1060, %v1057
    %v1064 = vadd.f32 %v618, 1.0
    %v1065 = vlog2.pop %v1064
    %v1066 = vmul.f32 %v1065, 0.6931472
    %v1067 = vmul.f32 -0.5, %v618
    %v1068 = vadd.f32 %v1067, 1.0
    %v1069 = vmul.f32 %v1068, %v618
    %v1070 = vand.u32 2147483647, %v618
    %vm1071 = vcmp.lt.f32.partialorder %v1070, 0.0004427343
    %v1072 = vsel %vm1071, %v1069, %v1066
    %v1073 = vadd.f32 %v620, 1.0
    %v1074 = vlog2.pop %v1073
    %v1075 = vmul.f32 %v1074, 0.6931472
    %v1076 = vmul.f32 -0.5, %v620
    %v1077 = vadd.f32 %v1076, 1.0
    %v1078 = vmul.f32 %v1077, %v620
    %v1079 = vand.u32 2147483647, %v620
    %vm1080 = vcmp.lt.f32.partialorder %v1079, 0.0004427343
    %v1081 = vsel %vm1080, %v1078, %v1075
    %v1082 = vadd.f32 %v622, 1.0
    %v1083 = vlog2.pop %v1082
    %v1084 = vmul.f32 %v1083, 0.6931472
    %v1085 = vmul.f32 -0.5, %v622
    %v1086 = vadd.f32 %v1085, 1.0
    %v1087 = vmul.f32 %v1086, %v622
    %v1088 = vand.u32 2147483647, %v622
    %vm1089 = vcmp.lt.f32.partialorder %v1088, 0.0004427343
    %v1090 = vsel %vm1089, %v1087, %v1084
    %v1091 = vadd.f32 %v624, 1.0
    %v1092 = vlog2.pop %v1091
    %v1093 = vmul.f32 %v1092, 0.6931472
    %v1094 = vmul.f32 -0.5, %v624
    %v1095 = vadd.f32 %v1094, 1.0
    %v1096 = vmul.f32 %v1095, %v624
    %v1097 = vand.u32 2147483647, %v624
    %vm1098 = vcmp.lt.f32.partialorder %v1097, 0.0004427343
    %v1099 = vsel %vm1098, %v1096, %v1093
    %v1100 = vadd.f32 %v626, 1.0
    %v1101 = vlog2.pop %v1100
    %v1102 = vmul.f32 %v1101, 0.6931472
    %v1103 = vmul.f32 -0.5, %v626
    %v1104 = vadd.f32 %v1103, 1.0
    %v1105 = vmul.f32 %v1104, %v626
    %v1106 = vand.u32 2147483647, %v626
    %vm1107 = vcmp.lt.f32.partialorder %v1106, 0.0004427343
    %v1108 = vsel %vm1107, %v1105, %v1102
    %v1109 = vadd.f32 %v628, 1.0
    %v1110 = vlog2.pop %v1109
    %v1111 = vmul.f32 %v1110, 0.6931472
    %v1112 = vmul.f32 -0.5, %v628
    %v1113 = vadd.f32 %v1112, 1.0
    %v1114 = vmul.f32 %v1113, %v628
    %v1115 = vand.u32 2147483647, %v628
    %vm1116 = vcmp.lt.f32.partialorder %v1115, 0.0004427343
    %v1117 = vsel %vm1116, %v1114, %v1111
    %v1118 = vadd.f32 %v630, 1.0
    %v1119 = vlog2.pop %v1118
    %v1120 = vmul.f32 %v1119, 0.6931472
    %v1121 = vmul.f32 -0.5, %v630
    %v1122 = vadd.f32 %v1121, 1.0
    %v1123 = vmul.f32 %v1122, %v630
    %v1124 = vand.u32 2147483647, %v630
    %vm1125 = vcmp.lt.f32.partialorder %v1124, 0.0004427343
    %v1126 = vsel %vm1125, %v1123, %v1120
    %v1127 = vadd.f32 %v632, 1.0
    %v1128 = vlog2.pop %v1127
    %v1129 = vmul.f32 %v1128, 0.6931472
    %v1130 = vmul.f32 -0.5, %v632
    %v1131 = vadd.f32 %v1130, 1.0
    %v1132 = vmul.f32 %v1131, %v632
    %v1133 = vand.u32 2147483647, %v632
    %vm1134 = vcmp.lt.f32.partialorder %v1133, 0.0004427343
    %v1135 = vsel %vm1134, %v1132, %v1129
    %v1136 = vadd.f32 %v634, 1.0
    %v1137 = vlog2.pop %v1136
    %v1138 = vmul.f32 %v1137, 0.6931472
    %v1139 = vmul.f32 -0.5, %v634
    %v1140 = vadd.f32 %v1139, 1.0
    %v1141 = vmul.f32 %v1140, %v634
    %v1142 = vand.u32 2147483647, %v634
    %vm1143 = vcmp.lt.f32.partialorder %v1142, 0.0004427343
    %v1144 = vsel %vm1143, %v1141, %v1138
    %v1145 = vadd.f32 %v636, 1.0
    %v1146 = vlog2.pop %v1145
    %v1147 = vmul.f32 %v1146, 0.6931472
    %v1148 = vmul.f32 -0.5, %v636
    %v1149 = vadd.f32 %v1148, 1.0
    %v1150 = vmul.f32 %v1149, %v636
    %v1151 = vand.u32 2147483647, %v636
    %vm1152 = vcmp.lt.f32.partialorder %v1151, 0.0004427343
    %v1153 = vsel %vm1152, %v1150, %v1147
    %v1154 = vadd.f32 %v638, 1.0
    %v1155 = vlog2.pop %v1154
    %v1156 = vmul.f32 %v1155, 0.6931472
    %v1157 = vmul.f32 -0.5, %v638
    %v1158 = vadd.f32 %v1157, 1.0
    %v1159 = vmul.f32 %v1158, %v638
    %v1160 = vand.u32 2147483647, %v638
    %vm1161 = vcmp.lt.f32.partialorder %v1160, 0.0004427343
    %v1162 = vsel %vm1161, %v1159, %v1156
    %v1163 = vadd.f32 %v640, 1.0
    %v1164 = vlog2.pop %v1163
    %v1165 = vmul.f32 %v1164, 0.6931472
    %v1166 = vmul.f32 -0.5, %v640
    %v1167 = vadd.f32 %v1166, 1.0
    %v1168 = vmul.f32 %v1167, %v640
    %v1169 = vand.u32 2147483647, %v640
    %vm1170 = vcmp.lt.f32.partialorder %v1169, 0.0004427343
    %v1171 = vsel %vm1170, %v1168, %v1165
    %v1172 = vadd.f32 %v642, 1.0
    %v1173 = vlog2.pop %v1172
    %v1174 = vmul.f32 %v1173, 0.6931472
    %v1175 = vmul.f32 -0.5, %v642
    %v1176 = vadd.f32 %v1175, 1.0
    %v1177 = vmul.f32 %v1176, %v642
    %v1178 = vand.u32 2147483647, %v642
    %vm1179 = vcmp.lt.f32.partialorder %v1178, 0.0004427343
    %v1180 = vsel %vm1179, %v1177, %v1174
    %v1181 = vadd.f32 %v644, 1.0
    %v1182 = vlog2.pop %v1181
    %v1183 = vmul.f32 %v1182, 0.6931472
    %v1184 = vmul.f32 -0.5, %v644
    %v1185 = vadd.f32 %v1184, 1.0
    %v1186 = vmul.f32 %v1185, %v644
    %v1187 = vand.u32 2147483647, %v644
    %vm1188 = vcmp.lt.f32.partialorder %v1187, 0.0004427343
    %v1189 = vsel %vm1188, %v1186, %v1183
    %v1190 = vadd.f32 %v646, 1.0
    %v1191 = vlog2.pop %v1190
    %v1192 = vmul.f32 %v1191, 0.6931472
    %v1193 = vmul.f32 -0.5, %v646
    %v1194 = vadd.f32 %v1193, 1.0
    %v1195 = vmul.f32 %v1194, %v646
    %v1196 = vand.u32 2147483647, %v646
    %vm1197 = vcmp.lt.f32.partialorder %v1196, 0.0004427343
    %v1198 = vsel %vm1197, %v1195, %v1192
    %v1199 = vadd.f32 %v648, 1.0
    %v1200 = vlog2.pop %v1199
    %v1201 = vmul.f32 %v1200, 0.6931472
    %v1202 = vmul.f32 -0.5, %v648
    %v1203 = vadd.f32 %v1202, 1.0
    %v1204 = vmul.f32 %v1203, %v648
    %v1205 = vand.u32 2147483647, %v648
    %vm1206 = vcmp.lt.f32.partialorder %v1205, 0.0004427343
    %v1207 = vsel %vm1206, %v1204, %v1201
    %v1208 = vadd.f32 %v650, 1.0
    %v1209 = vlog2.pop %v1208
    %v1210 = vmul.f32 %v1209, 0.6931472
    %v1211 = vmul.f32 -0.5, %v650
    %v1212 = vadd.f32 %v1211, 1.0
    %v1213 = vmul.f32 %v1212, %v650
    %v1214 = vand.u32 2147483647, %v650
    %vm1215 = vcmp.lt.f32.partialorder %v1214, 0.0004427343
    %v1216 = vsel %vm1215, %v1213, %v1210
    %v1217 = vadd.f32 %v652, 1.0
    %v1218 = vlog2.pop %v1217
    %v1219 = vmul.f32 %v1218, 0.6931472
    %v1220 = vmul.f32 -0.5, %v652
    %v1221 = vadd.f32 %v1220, 1.0
    %v1222 = vmul.f32 %v1221, %v652
    %v1223 = vand.u32 2147483647, %v652
    %vm1224 = vcmp.lt.f32.partialorder %v1223, 0.0004427343
    %v1225 = vsel %vm1224, %v1222, %v1219
    %v1226 = vadd.f32 %v654, 1.0
    %v1227 = vlog2.pop %v1226
    %v1228 = vmul.f32 %v1227, 0.6931472
    %v1229 = vmul.f32 -0.5, %v654
    %v1230 = vadd.f32 %v1229, 1.0
    %v1231 = vmul.f32 %v1230, %v654
    %v1232 = vand.u32 2147483647, %v654
    %vm1233 = vcmp.lt.f32.partialorder %v1232, 0.0004427343
    %v1234 = vsel %vm1233, %v1231, %v1228
    %v1235 = vadd.f32 %v656, 1.0
    %v1236 = vlog2.pop %v1235
    %v1237 = vmul.f32 %v1236, 0.6931472
    %v1238 = vmul.f32 -0.5, %v656
    %v1239 = vadd.f32 %v1238, 1.0
    %v1240 = vmul.f32 %v1239, %v656
    %v1241 = vand.u32 2147483647, %v656
    %vm1242 = vcmp.lt.f32.partialorder %v1241, 0.0004427343
    %v1243 = vsel %vm1242, %v1240, %v1237
    %v1244 = vadd.f32 %v658, 1.0
    %v1245 = vlog2.pop %v1244
    %v1246 = vmul.f32 %v1245, 0.6931472
    %v1247 = vmul.f32 -0.5, %v658
    %v1248 = vadd.f32 %v1247, 1.0
    %v1249 = vmul.f32 %v1248, %v658
    %v1250 = vand.u32 2147483647, %v658
    %vm1251 = vcmp.lt.f32.partialorder %v1250, 0.0004427343
    %v1252 = vsel %vm1251, %v1249, %v1246
    %v1253 = vadd.f32 %v660, 1.0
    %v1254 = vlog2.pop %v1253
    %v1255 = vmul.f32 %v1254, 0.6931472
    %v1256 = vmul.f32 -0.5, %v660
    %v1257 = vadd.f32 %v1256, 1.0
    %v1258 = vmul.f32 %v1257, %v660
    %v1259 = vand.u32 2147483647, %v660
    %vm1260 = vcmp.lt.f32.partialorder %v1259, 0.0004427343
    %v1261 = vsel %vm1260, %v1258, %v1255
    %v1262 = vadd.f32 %v662, 1.0
    %v1263 = vlog2.pop %v1262
    %v1264 = vmul.f32 %v1263, 0.6931472
    %v1265 = vmul.f32 -0.5, %v662
    %v1266 = vadd.f32 %v1265, 1.0
    %v1267 = vmul.f32 %v1266, %v662
    %v1268 = vand.u32 2147483647, %v662
    %vm1269 = vcmp.lt.f32.partialorder %v1268, 0.0004427343
    %v1270 = vsel %vm1269, %v1267, %v1264
    %v1271 = vadd.f32 %v664, 1.0
    %v1272 = vlog2.pop %v1271
    %v1273 = vmul.f32 %v1272, 0.6931472
    %v1274 = vmul.f32 -0.5, %v664
    %v1275 = vadd.f32 %v1274, 1.0
    %v1276 = vmul.f32 %v1275, %v664
    %v1277 = vand.u32 2147483647, %v664
    %vm1278 = vcmp.lt.f32.partialorder %v1277, 0.0004427343
    %v1279 = vsel %vm1278, %v1276, %v1273
    %v1280 = vadd.f32 %v666, 1.0
    %v1281 = vlog2.pop %v1280
    %v1282 = vmul.f32 %v1281, 0.6931472
    %v1283 = vmul.f32 -0.5, %v666
    %v1284 = vadd.f32 %v1283, 1.0
    %v1285 = vmul.f32 %v1284, %v666
    %v1286 = vand.u32 2147483647, %v666
    %vm1287 = vcmp.lt.f32.partialorder %v1286, 0.0004427343
    %v1288 = vsel %vm1287, %v1285, %v1282
    %v1289 = vadd.f32 %v668, 1.0
    %v1290 = vlog2.pop %v1289
    %v1291 = vmul.f32 %v1290, 0.6931472
    %v1292 = vmul.f32 -0.5, %v668
    %v1293 = vadd.f32 %v1292, 1.0
    %v1294 = vmul.f32 %v1293, %v668
    %v1295 = vand.u32 2147483647, %v668
    %vm1296 = vcmp.lt.f32.partialorder %v1295, 0.0004427343
    %v1297 = vsel %vm1296, %v1294, %v1291
    %v1298 = vadd.f32 %v670, 1.0
    %v1299 = vlog2.pop %v1298
    %v1300 = vmul.f32 %v1299, 0.6931472
    %v1301 = vmul.f32 -0.5, %v670
    %v1302 = vadd.f32 %v1301, 1.0
    %v1303 = vmul.f32 %v1302, %v670
    %v1304 = vand.u32 2147483647, %v670
    %vm1305 = vcmp.lt.f32.partialorder %v1304, 0.0004427343
    %v1306 = vsel %vm1305, %v1303, %v1300
    %v1307 = vadd.f32 %v672, 1.0
    %v1308 = vlog2.pop %v1307
    %v1309 = vmul.f32 %v1308, 0.6931472
    %v1310 = vmul.f32 -0.5, %v672
    %v1311 = vadd.f32 %v1310, 1.0
    %v1312 = vmul.f32 %v1311, %v672
    %v1313 = vand.u32 2147483647, %v672
    %vm1314 = vcmp.lt.f32.partialorder %v1313, 0.0004427343
    %v1315 = vsel %vm1314, %v1312, %v1309
    %v1316 = vadd.f32 %v674, 1.0
    %v1317 = vlog2.pop %v1316
    %v1318 = vmul.f32 %v1317, 0.6931472
    %v1319 = vmul.f32 -0.5, %v674
    %v1320 = vadd.f32 %v1319, 1.0
    %v1321 = vmul.f32 %v1320, %v674
    %v1322 = vand.u32 2147483647, %v674
    %vm1323 = vcmp.lt.f32.partialorder %v1322, 0.0004427343
    %v1324 = vsel %vm1323, %v1321, %v1318
    %v1325 = vadd.f32 %v676, 1.0
    %v1326 = vlog2.pop %v1325
    %v1327 = vmul.f32 %v1326, 0.6931472
    %v1328 = vmul.f32 -0.5, %v676
    %v1329 = vadd.f32 %v1328, 1.0
    %v1330 = vmul.f32 %v1329, %v676
    %v1331 = vand.u32 2147483647, %v676
    %vm1332 = vcmp.lt.f32.partialorder %v1331, 0.0004427343
    %v1333 = vsel %vm1332, %v1330, %v1327
    %v1334 = vadd.f32 %v678, 1.0
    %v1335 = vlog2.pop %v1334
    %v1336 = vmul.f32 %v1335, 0.6931472
    %v1337 = vmul.f32 -0.5, %v678
    %v1338 = vadd.f32 %v1337, 1.0
    %v1339 = vmul.f32 %v1338, %v678
    %v1340 = vand.u32 2147483647, %v678
    %vm1341 = vcmp.lt.f32.partialorder %v1340, 0.0004427343
    %v1342 = vsel %vm1341, %v1339, %v1336
    %v1343 = vadd.f32 %v680, 1.0
    %v1344 = vlog2.pop %v1343
    %v1345 = vmul.f32 %v1344, 0.6931472
    %v1346 = vmul.f32 -0.5, %v680
    %v1347 = vadd.f32 %v1346, 1.0
    %v1348 = vmul.f32 %v1347, %v680
    %v1349 = vand.u32 2147483647, %v680
    %vm1350 = vcmp.lt.f32.partialorder %v1349, 0.0004427343
    %v1351 = vsel %vm1350, %v1348, %v1345
    %v1352 = vadd.f32 %v682, 1.0
    %v1353 = vlog2.pop %v1352
    %v1354 = vmul.f32 %v1353, 0.6931472
    %v1355 = vmul.f32 -0.5, %v682
    %v1356 = vadd.f32 %v1355, 1.0
    %v1357 = vmul.f32 %v1356, %v682
    %v1358 = vand.u32 2147483647, %v682
    %vm1359 = vcmp.lt.f32.partialorder %v1358, 0.0004427343
    %v1360 = vsel %vm1359, %v1357, %v1354
    %v1361 = vadd.f32 %v684, 1.0
    %v1362 = vlog2.pop %v1361
    %v1363 = vmul.f32 %v1362, 0.6931472
    %v1364 = vmul.f32 -0.5, %v684
    %v1365 = vadd.f32 %v1364, 1.0
    %v1366 = vmul.f32 %v1365, %v684
    %v1367 = vand.u32 2147483647, %v684
    %vm1368 = vcmp.lt.f32.partialorder %v1367, 0.0004427343
    %v1369 = vsel %vm1368, %v1366, %v1363
    %v1370 = vadd.f32 %v686, 1.0
    %v1371 = vlog2.pop %v1370
    %v1372 = vmul.f32 %v1371, 0.6931472
    %v1373 = vmul.f32 -0.5, %v686
    %v1374 = vadd.f32 %v1373, 1.0
    %v1375 = vmul.f32 %v1374, %v686
    %v1376 = vand.u32 2147483647, %v686
    %vm1377 = vcmp.lt.f32.partialorder %v1376, 0.0004427343
    %v1378 = vsel %vm1377, %v1375, %v1372
    %v1379 = vadd.f32 %v688, 1.0
    %v1380 = vlog2.pop %v1379
    %v1381 = vmul.f32 %v1380, 0.6931472
    %v1382 = vmul.f32 -0.5, %v688
    %v1383 = vadd.f32 %v1382, 1.0
    %v1384 = vmul.f32 %v1383, %v688
    %v1385 = vand.u32 2147483647, %v688
    %vm1386 = vcmp.lt.f32.partialorder %v1385, 0.0004427343
    %v1387 = vsel %vm1386, %v1384, %v1381
    %v1388 = vadd.f32 %v690, 1.0
    %v1389 = vlog2.pop %v1388
    %v1390 = vmul.f32 %v1389, 0.6931472
    %v1391 = vmul.f32 -0.5, %v690
    %v1392 = vadd.f32 %v1391, 1.0
    %v1393 = vmul.f32 %v1392, %v690
    %v1394 = vand.u32 2147483647, %v690
    %vm1395 = vcmp.lt.f32.partialorder %v1394, 0.0004427343
    %v1396 = vsel %vm1395, %v1393, %v1390
    %v1397 = vadd.f32 %v692, 1.0
    %v1398 = vlog2.pop %v1397
    %v1399 = vmul.f32 %v1398, 0.6931472
    %v1400 = vmul.f32 -0.5, %v692
    %v1401 = vadd.f32 %v1400, 1.0
    %v1402 = vmul.f32 %v1401, %v692
    %v1403 = vand.u32 2147483647, %v692
    %vm1404 = vcmp.lt.f32.partialorder %v1403, 0.0004427343
    %v1405 = vsel %vm1404, %v1402, %v1399
    %v1406 = vadd.f32 %v694, 1.0
    %v1407 = vlog2.pop %v1406
    %v1408 = vmul.f32 %v1407, 0.6931472
    %v1409 = vmul.f32 -0.5, %v694
    %v1410 = vadd.f32 %v1409, 1.0
    %v1411 = vmul.f32 %v1410, %v694
    %v1412 = vand.u32 2147483647, %v694
    %vm1413 = vcmp.lt.f32.partialorder %v1412, 0.0004427343
    %v1414 = vsel %vm1413, %v1411, %v1408
    %v1415 = vadd.f32 %v696, 1.0
    %v1416 = vlog2.pop %v1415
    %v1417 = vmul.f32 %v1416, 0.6931472
    %v1418 = vmul.f32 -0.5, %v696
    %v1419 = vadd.f32 %v1418, 1.0
    %v1420 = vmul.f32 %v1419, %v696
    %v1421 = vand.u32 2147483647, %v696
    %vm1422 = vcmp.lt.f32.partialorder %v1421, 0.0004427343
    %v1423 = vsel %vm1422, %v1420, %v1417
    %v1424 = vadd.f32 %v698, 1.0
    %v1425 = vlog2.pop %v1424
    %v1426 = vmul.f32 %v1425, 0.6931472
    %v1427 = vmul.f32 -0.5, %v698
    %v1428 = vadd.f32 %v1427, 1.0
    %v1429 = vmul.f32 %v1428, %v698
    %v1430 = vand.u32 2147483647, %v698
    %vm1431 = vcmp.lt.f32.partialorder %v1430, 0.0004427343
    %v1432 = vsel %vm1431, %v1429, %v1426
    %v1433 = vadd.f32 %v700, 1.0
    %v1434 = vlog2.pop %v1433
    %v1435 = vmul.f32 %v1434, 0.6931472
    %v1436 = vmul.f32 -0.5, %v700
    %v1437 = vadd.f32 %v1436, 1.0
    %v1438 = vmul.f32 %v1437, %v700
    %v1439 = vand.u32 2147483647, %v700
    %vm1440 = vcmp.lt.f32.partialorder %v1439, 0.0004427343
    %v1441 = vsel %vm1440, %v1438, %v1435
    %v1442 = vadd.f32 %v702, 1.0
    %v1443 = vlog2.pop %v1442
    %v1444 = vmul.f32 %v1443, 0.6931472
    %v1445 = vmul.f32 -0.5, %v702
    %v1446 = vadd.f32 %v1445, 1.0
    %v1447 = vmul.f32 %v1446, %v702
    %v1448 = vand.u32 2147483647, %v702
    %vm1449 = vcmp.lt.f32.partialorder %v1448, 0.0004427343
    %v1450 = vsel %vm1449, %v1447, %v1444
    %v1451 = vadd.f32 %v704, 1.0
    %v1452 = vlog2.pop %v1451
    %v1453 = vmul.f32 %v1452, 0.6931472
    %v1454 = vmul.f32 -0.5, %v704
    %v1455 = vadd.f32 %v1454, 1.0
    %v1456 = vmul.f32 %v1455, %v704
    %v1457 = vand.u32 2147483647, %v704
    %vm1458 = vcmp.lt.f32.partialorder %v1457, 0.0004427343
    %v1459 = vsel %vm1458, %v1456, %v1453
    %v1460 = vadd.f32 %v706, 1.0
    %v1461 = vlog2.pop %v1460
    %v1462 = vmul.f32 %v1461, 0.6931472
    %v1463 = vmul.f32 -0.5, %v706
    %v1464 = vadd.f32 %v1463, 1.0
    %v1465 = vmul.f32 %v1464, %v706
    %v1466 = vand.u32 2147483647, %v706
    %vm1467 = vcmp.lt.f32.partialorder %v1466, 0.0004427343
    %v1468 = vsel %vm1467, %v1465, %v1462
    %v1469 = vadd.f32 %v708, 1.0
    %v1470 = vlog2.pop %v1469
    %v1471 = vmul.f32 %v1470, 0.6931472
    %v1472 = vmul.f32 -0.5, %v708
    %v1473 = vadd.f32 %v1472, 1.0
    %v1474 = vmul.f32 %v1473, %v708
    %v1475 = vand.u32 2147483647, %v708
    %vm1476 = vcmp.lt.f32.partialorder %v1475, 0.0004427343
    %v1477 = vsel %vm1476, %v1474, %v1471
    %v1478 = vadd.f32 %v710, 1.0
    %v1479 = vlog2.pop %v1478
    %v1480 = vmul.f32 %v1479, 0.6931472
    %v1481 = vmul.f32 -0.5, %v710
    %v1482 = vadd.f32 %v1481, 1.0
    %v1483 = vmul.f32 %v1482, %v710
    %v1484 = vand.u32 2147483647, %v710
    %vm1485 = vcmp.lt.f32.partialorder %v1484, 0.0004427343
    %v1486 = vsel %vm1485, %v1483, %v1480
    %v1487 = vadd.f32 %v712, 1.0
    %v1488 = vlog2.pop %v1487
    %v1489 = vmul.f32 %v1488, 0.6931472
    %v1490 = vmul.f32 -0.5, %v712
    %v1491 = vadd.f32 %v1490, 1.0
    %v1492 = vmul.f32 %v1491, %v712
    %v1493 = vand.u32 2147483647, %v712
    %vm1494 = vcmp.lt.f32.partialorder %v1493, 0.0004427343
    %v1495 = vsel %vm1494, %v1492, %v1489
    %v1496 = vadd.f32 %v714, 1.0
    %v1497 = vlog2.pop %v1496
    %v1498 = vmul.f32 %v1497, 0.6931472
    %v1499 = vmul.f32 -0.5, %v714
    %v1500 = vadd.f32 %v1499, 1.0
    %v1501 = vmul.f32 %v1500, %v714
    %v1502 = vand.u32 2147483647, %v714
    %vm1503 = vcmp.lt.f32.partialorder %v1502, 0.0004427343
    %v1504 = vsel %vm1503, %v1501, %v1498
    %v1505 = vadd.f32 %v716, 1.0
    %v1506 = vlog2.pop %v1505
    %v1507 = vmul.f32 %v1506, 0.6931472
    %v1508 = vmul.f32 -0.5, %v716
    %v1509 = vadd.f32 %v1508, 1.0
    %v1510 = vmul.f32 %v1509, %v716
    %v1511 = vand.u32 2147483647, %v716
    %vm1512 = vcmp.lt.f32.partialorder %v1511, 0.0004427343
    %v1513 = vsel %vm1512, %v1510, %v1507
    %v1514 = vadd.f32 %v718, 1.0
    %v1515 = vlog2.pop %v1514
    %v1516 = vmul.f32 %v1515, 0.6931472
    %v1517 = vmul.f32 -0.5, %v718
    %v1518 = vadd.f32 %v1517, 1.0
    %v1519 = vmul.f32 %v1518, %v718
    %v1520 = vand.u32 2147483647, %v718
    %vm1521 = vcmp.lt.f32.partialorder %v1520, 0.0004427343
    %v1522 = vsel %vm1521, %v1519, %v1516
    %v1523 = vadd.f32 %v720, 1.0
    %v1524 = vlog2.pop %v1523
    %v1525 = vmul.f32 %v1524, 0.6931472
    %v1526 = vmul.f32 -0.5, %v720
    %v1527 = vadd.f32 %v1526, 1.0
    %v1528 = vmul.f32 %v1527, %v720
    %v1529 = vand.u32 2147483647, %v720
    %vm1530 = vcmp.lt.f32.partialorder %v1529, 0.0004427343
    %v1531 = vsel %vm1530, %v1528, %v1525
    %v1532 = vadd.f32 %v722, 1.0
    %v1533 = vlog2.pop %v1532
    %v1534 = vmul.f32 %v1533, 0.6931472
    %v1535 = vmul.f32 -0.5, %v722
    %v1536 = vadd.f32 %v1535, 1.0
    %v1537 = vmul.f32 %v1536, %v722
    %v1538 = vand.u32 2147483647, %v722
    %vm1539 = vcmp.lt.f32.partialorder %v1538, 0.0004427343
    %v1540 = vsel %vm1539, %v1537, %v1534
    %v1541 = vadd.f32 %v724, 1.0
    %v1542 = vlog2.pop %v1541
    %v1543 = vmul.f32 %v1542, 0.6931472
    %v1544 = vmul.f32 -0.5, %v724
    %v1545 = vadd.f32 %v1544, 1.0
    %v1546 = vmul.f32 %v1545, %v724
    %v1547 = vand.u32 2147483647, %v724
    %vm1548 = vcmp.lt.f32.partialorder %v1547, 0.0004427343
    %v1549 = vsel %vm1548, %v1546, %v1543
    %v1550 = vadd.f32 %v726, 1.0
    %v1551 = vlog2.pop %v1550
    %v1552 = vmul.f32 %v1551, 0.6931472
    %v1553 = vmul.f32 -0.5, %v726
    %v1554 = vadd.f32 %v1553, 1.0
    %v1555 = vmul.f32 %v1554, %v726
    %v1556 = vand.u32 2147483647, %v726
    %vm1557 = vcmp.lt.f32.partialorder %v1556, 0.0004427343
    %v1558 = vsel %vm1557, %v1555, %v1552
    %v1559 = vadd.f32 %v728, 1.0
    %v1560 = vlog2.pop %v1559
    %v1561 = vmul.f32 %v1560, 0.6931472
    %v1562 = vmul.f32 -0.5, %v728
    %v1563 = vadd.f32 %v1562, 1.0
    %v1564 = vmul.f32 %v1563, %v728
    %v1565 = vand.u32 2147483647, %v728
    %vm1566 = vcmp.lt.f32.partialorder %v1565, 0.0004427343
    %v1567 = vsel %vm1566, %v1564, %v1561
    %v1568 = vadd.f32 %v730, 1.0
    %v1569 = vlog2.pop %v1568
    %v1570 = vmul.f32 %v1569, 0.6931472
    %v1571 = vmul.f32 -0.5, %v730
    %v1572 = vadd.f32 %v1571, 1.0
    %v1573 = vmul.f32 %v1572, %v730
    %v1574 = vand.u32 2147483647, %v730
    %vm1575 = vcmp.lt.f32.partialorder %v1574, 0.0004427343
    %v1576 = vsel %vm1575, %v1573, %v1570
    %v1577 = vadd.f32 %v732, 1.0
    %v1578 = vlog2.pop %v1577
    %v1579 = vmul.f32 %v1578, 0.6931472
    %v1580 = vmul.f32 -0.5, %v732
    %v1581 = vadd.f32 %v1580, 1.0
    %v1582 = vmul.f32 %v1581, %v732
    %v1583 = vand.u32 2147483647, %v732
    %vm1584 = vcmp.lt.f32.partialorder %v1583, 0.0004427343
    %v1585 = vsel %vm1584, %v1582, %v1579
    %v1586 = vadd.f32 %v734, 1.0
    %v1587 = vlog2.pop %v1586
    %v1588 = vmul.f32 %v1587, 0.6931472
    %v1589 = vmul.f32 -0.5, %v734
    %v1590 = vadd.f32 %v1589, 1.0
    %v1591 = vmul.f32 %v1590, %v734
    %v1592 = vand.u32 2147483647, %v734
    %vm1593 = vcmp.lt.f32.partialorder %v1592, 0.0004427343
    %v1594 = vsel %vm1593, %v1591, %v1588
    %v1595 = vadd.f32 %v736, 1.0
    %v1596 = vlog2.pop %v1595
    %v1597 = vmul.f32 %v1596, 0.6931472
    %v1598 = vmul.f32 -0.5, %v736
    %v1599 = vadd.f32 %v1598, 1.0
    %v1600 = vmul.f32 %v1599, %v736
    %v1601 = vand.u32 2147483647, %v736
    %vm1602 = vcmp.lt.f32.partialorder %v1601, 0.0004427343
    %v1603 = vsel %vm1602, %v1600, %v1597
    %v1604 = vadd.f32 %v738, 1.0
    %v1605 = vlog2.pop %v1604
    %v1606 = vmul.f32 %v1605, 0.6931472
    %v1607 = vmul.f32 -0.5, %v738
    %v1608 = vadd.f32 %v1607, 1.0
    %v1609 = vmul.f32 %v1608, %v738
    %v1610 = vand.u32 2147483647, %v738
    %vm1611 = vcmp.lt.f32.partialorder %v1610, 0.0004427343
    %v1612 = vsel %vm1611, %v1609, %v1606
    %v1613 = vadd.f32 %v740, 1.0
    %v1614 = vlog2.pop %v1613
    %v1615 = vmul.f32 %v1614, 0.6931472
    %v1616 = vmul.f32 -0.5, %v740
    %v1617 = vadd.f32 %v1616, 1.0
    %v1618 = vmul.f32 %v1617, %v740
    %v1619 = vand.u32 2147483647, %v740
    %vm1620 = vcmp.lt.f32.partialorder %v1619, 0.0004427343
    %v1621 = vsel %vm1620, %v1618, %v1615
    %v1622 = vadd.f32 %v742, 1.0
    %v1623 = vlog2.pop %v1622
    %v1624 = vmul.f32 %v1623, 0.6931472
    %v1625 = vmul.f32 -0.5, %v742
    %v1626 = vadd.f32 %v1625, 1.0
    %v1627 = vmul.f32 %v1626, %v742
    %v1628 = vand.u32 2147483647, %v742
    %vm1629 = vcmp.lt.f32.partialorder %v1628, 0.0004427343
    %v1630 = vsel %vm1629, %v1627, %v1624
    %v1631 = vadd.f32 %v744, 1.0
    %v1632 = vlog2.pop %v1631
    %v1633 = vmul.f32 %v1632, 0.6931472
    %v1634 = vmul.f32 -0.5, %v744
    %v1635 = vadd.f32 %v1634, 1.0
    %v1636 = vmul.f32 %v1635, %v744
    %v1637 = vand.u32 2147483647, %v744
    %vm1638 = vcmp.lt.f32.partialorder %v1637, 0.0004427343
    %v1639 = vsel %vm1638, %v1636, %v1633
    %v1640 = vadd.f32 %v746, 1.0
    %v1641 = vlog2.pop %v1640
    %v1642 = vmul.f32 %v1641, 0.6931472
    %v1643 = vmul.f32 -0.5, %v746
    %v1644 = vadd.f32 %v1643, 1.0
    %v1645 = vmul.f32 %v1644, %v746
    %v1646 = vand.u32 2147483647, %v746
    %vm1647 = vcmp.lt.f32.partialorder %v1646, 0.0004427343
    %v1648 = vsel %vm1647, %v1645, %v1642
    %v1649 = vadd.f32 %v748, 1.0
    %v1650 = vlog2.pop %v1649
    %v1651 = vmul.f32 %v1650, 0.6931472
    %v1652 = vmul.f32 -0.5, %v748
    %v1653 = vadd.f32 %v1652, 1.0
    %v1654 = vmul.f32 %v1653, %v748
    %v1655 = vand.u32 2147483647, %v748
    %vm1656 = vcmp.lt.f32.partialorder %v1655, 0.0004427343
    %v1657 = vsel %vm1656, %v1654, %v1651
    %v1658 = vadd.f32 %v750, 1.0
    %v1659 = vlog2.pop %v1658
    %v1660 = vmul.f32 %v1659, 0.6931472
    %v1661 = vmul.f32 -0.5, %v750
    %v1662 = vadd.f32 %v1661, 1.0
    %v1663 = vmul.f32 %v1662, %v750
    %v1664 = vand.u32 2147483647, %v750
    %vm1665 = vcmp.lt.f32.partialorder %v1664, 0.0004427343
    %v1666 = vsel %vm1665, %v1663, %v1660
    %v1667 = vadd.f32 %v752, 1.0
    %v1668 = vlog2.pop %v1667
    %v1669 = vmul.f32 %v1668, 0.6931472
    %v1670 = vmul.f32 -0.5, %v752
    %v1671 = vadd.f32 %v1670, 1.0
    %v1672 = vmul.f32 %v1671, %v752
    %v1673 = vand.u32 2147483647, %v752
    %vm1674 = vcmp.lt.f32.partialorder %v1673, 0.0004427343
    %v1675 = vsel %vm1674, %v1672, %v1669
    %v1676 = vadd.f32 %v754, 1.0
    %v1677 = vlog2.pop %v1676
    %v1678 = vmul.f32 %v1677, 0.6931472
    %v1679 = vmul.f32 -0.5, %v754
    %v1680 = vadd.f32 %v1679, 1.0
    %v1681 = vmul.f32 %v1680, %v754
    %v1682 = vand.u32 2147483647, %v754
    %vm1683 = vcmp.lt.f32.partialorder %v1682, 0.0004427343
    %v1684 = vsel %vm1683, %v1681, %v1678
    %v1685 = vadd.f32 %v756, 1.0
    %v1686 = vlog2.pop %v1685
    %v1687 = vmul.f32 %v1686, 0.6931472
    %v1688 = vmul.f32 -0.5, %v756
    %v1689 = vadd.f32 %v1688, 1.0
    %v1690 = vmul.f32 %v1689, %v756
    %v1691 = vand.u32 2147483647, %v756
    %vm1692 = vcmp.lt.f32.partialorder %v1691, 0.0004427343
    %v1693 = vsel %vm1692, %v1690, %v1687
    %v1694 = vadd.f32 %v758, 1.0
    %v1695 = vlog2.pop %v1694
    %v1696 = vmul.f32 %v1695, 0.6931472
    %v1697 = vmul.f32 -0.5, %v758
    %v1698 = vadd.f32 %v1697, 1.0
    %v1699 = vmul.f32 %v1698, %v758
    %v1700 = vand.u32 2147483647, %v758
    %vm1701 = vcmp.lt.f32.partialorder %v1700, 0.0004427343
    %v1702 = vsel %vm1701, %v1699, %v1696
    %v1703 = vadd.f32 %v760, 1.0
    %v1704 = vlog2.pop %v1703
    %v1705 = vmul.f32 %v1704, 0.6931472
    %v1706 = vmul.f32 -0.5, %v760
    %v1707 = vadd.f32 %v1706, 1.0
    %v1708 = vmul.f32 %v1707, %v760
    %v1709 = vand.u32 2147483647, %v760
    %vm1710 = vcmp.lt.f32.partialorder %v1709, 0.0004427343
    %v1711 = vsel %vm1710, %v1708, %v1705
    %v1712 = vadd.f32 %v762, 1.0
    %v1713 = vlog2.pop %v1712
    %v1714 = vmul.f32 %v1713, 0.6931472
    %v1715 = vmul.f32 -0.5, %v762
    %v1716 = vadd.f32 %v1715, 1.0
    %v1717 = vmul.f32 %v1716, %v762
    %v1718 = vand.u32 2147483647, %v762
    %vm1719 = vcmp.lt.f32.partialorder %v1718, 0.0004427343
    %v1720 = vsel %vm1719, %v1717, %v1714
    %v1721 = vadd.f32 %v764, 1.0
    %v1722 = vlog2.pop %v1721
    %v1723 = vmul.f32 %v1722, 0.6931472
    %v1724 = vmul.f32 -0.5, %v764
    %v1725 = vadd.f32 %v1724, 1.0
    %v1726 = vmul.f32 %v1725, %v764
    %v1727 = vand.u32 2147483647, %v764
    %vm1728 = vcmp.lt.f32.partialorder %v1727, 0.0004427343
    %v1729 = vsel %vm1728, %v1726, %v1723
    %v1730 = vadd.f32 %v766, 1.0
    %v1731 = vlog2.pop %v1730
    %v1732 = vmul.f32 %v1731, 0.6931472
    %v1733 = vmul.f32 -0.5, %v766
    %v1734 = vadd.f32 %v1733, 1.0
    %v1735 = vmul.f32 %v1734, %v766
    %v1736 = vand.u32 2147483647, %v766
    %vm1737 = vcmp.lt.f32.partialorder %v1736, 0.0004427343
    %v1738 = vsel %vm1737, %v1735, %v1732
    %v1739 = vadd.f32 %v768, 1.0
    %v1740 = vlog2.pop %v1739
    %v1741 = vmul.f32 %v1740, 0.6931472
    %v1742 = vmul.f32 -0.5, %v768
    %v1743 = vadd.f32 %v1742, 1.0
    %v1744 = vmul.f32 %v1743, %v768
    %v1745 = vand.u32 2147483647, %v768
    %vm1746 = vcmp.lt.f32.partialorder %v1745, 0.0004427343
    %v1747 = vsel %vm1746, %v1744, %v1741
    %v1748 = vadd.f32 %v770, 1.0
    %v1749 = vlog2.pop %v1748
    %v1750 = vmul.f32 %v1749, 0.6931472
    %v1751 = vmul.f32 -0.5, %v770
    %v1752 = vadd.f32 %v1751, 1.0
    %v1753 = vmul.f32 %v1752, %v770
    %v1754 = vand.u32 2147483647, %v770
    %vm1755 = vcmp.lt.f32.partialorder %v1754, 0.0004427343
    %v1756 = vsel %vm1755, %v1753, %v1750
    %v1757 = vadd.f32 %v772, 1.0
    %v1758 = vlog2.pop %v1757
    %v1759 = vmul.f32 %v1758, 0.6931472
    %v1760 = vmul.f32 -0.5, %v772
    %v1761 = vadd.f32 %v1760, 1.0
    %v1762 = vmul.f32 %v1761, %v772
    %v1763 = vand.u32 2147483647, %v772
    %vm1764 = vcmp.lt.f32.partialorder %v1763, 0.0004427343
    %v1765 = vsel %vm1764, %v1762, %v1759
    %v1766 = vadd.f32 %v774, 1.0
    %v1767 = vlog2.pop %v1766
    %v1768 = vmul.f32 %v1767, 0.6931472
    %v1769 = vmul.f32 -0.5, %v774
    %v1770 = vadd.f32 %v1769, 1.0
    %v1771 = vmul.f32 %v1770, %v774
    %v1772 = vand.u32 2147483647, %v774
    %vm1773 = vcmp.lt.f32.partialorder %v1772, 0.0004427343
    %v1774 = vsel %vm1773, %v1771, %v1768
    %v1775 = vadd.f32 %v776, 1.0
    %v1776 = vlog2.pop %v1775
    %v1777 = vmul.f32 %v1776, 0.6931472
    %v1778 = vmul.f32 -0.5, %v776
    %v1779 = vadd.f32 %v1778, 1.0
    %v1780 = vmul.f32 %v1779, %v776
    %v1781 = vand.u32 2147483647, %v776
    %vm1782 = vcmp.lt.f32.partialorder %v1781, 0.0004427343
    %v1783 = vsel %vm1782, %v1780, %v1777
    %v1784 = vadd.f32 %v778, 1.0
    %v1785 = vlog2.pop %v1784
    %v1786 = vmul.f32 %v1785, 0.6931472
    %v1787 = vmul.f32 -0.5, %v778
    %v1788 = vadd.f32 %v1787, 1.0
    %v1789 = vmul.f32 %v1788, %v778
    %v1790 = vand.u32 2147483647, %v778
    %vm1791 = vcmp.lt.f32.partialorder %v1790, 0.0004427343
    %v1792 = vsel %vm1791, %v1789, %v1786
    %v1793 = vadd.f32 %v780, 1.0
    %v1794 = vlog2.pop %v1793
    %v1795 = vmul.f32 %v1794, 0.6931472
    %v1796 = vmul.f32 -0.5, %v780
    %v1797 = vadd.f32 %v1796, 1.0
    %v1798 = vmul.f32 %v1797, %v780
    %v1799 = vand.u32 2147483647, %v780
    %vm1800 = vcmp.lt.f32.partialorder %v1799, 0.0004427343
    %v1801 = vsel %vm1800, %v1798, %v1795
    %v1802 = vadd.f32 %v782, 1.0
    %v1803 = vlog2.pop %v1802
    %v1804 = vmul.f32 %v1803, 0.6931472
    %v1805 = vmul.f32 -0.5, %v782
    %v1806 = vadd.f32 %v1805, 1.0
    %v1807 = vmul.f32 %v1806, %v782
    %v1808 = vand.u32 2147483647, %v782
    %vm1809 = vcmp.lt.f32.partialorder %v1808, 0.0004427343
    %v1810 = vsel %vm1809, %v1807, %v1804
    %v1811 = vadd.f32 %v784, 1.0
    %v1812 = vlog2.pop %v1811
    %v1813 = vmul.f32 %v1812, 0.6931472
    %v1814 = vmul.f32 -0.5, %v784
    %v1815 = vadd.f32 %v1814, 1.0
    %v1816 = vmul.f32 %v1815, %v784
    %v1817 = vand.u32 2147483647, %v784
    %vm1818 = vcmp.lt.f32.partialorder %v1817, 0.0004427343
    %v1819 = vsel %vm1818, %v1816, %v1813
    %v1820 = vadd.f32 %v786, 1.0
    %v1821 = vlog2.pop %v1820
    %v1822 = vmul.f32 %v1821, 0.6931472
    %v1823 = vmul.f32 -0.5, %v786
    %v1824 = vadd.f32 %v1823, 1.0
    %v1825 = vmul.f32 %v1824, %v786
    %v1826 = vand.u32 2147483647, %v786
    %vm1827 = vcmp.lt.f32.partialorder %v1826, 0.0004427343
    %v1828 = vsel %vm1827, %v1825, %v1822
    %v1829 = vadd.f32 %v788, 1.0
    %v1830 = vlog2.pop %v1829
    %v1831 = vmul.f32 %v1830, 0.6931472
    %v1832 = vmul.f32 -0.5, %v788
    %v1833 = vadd.f32 %v1832, 1.0
    %v1834 = vmul.f32 %v1833, %v788
    %v1835 = vand.u32 2147483647, %v788
    %vm1836 = vcmp.lt.f32.partialorder %v1835, 0.0004427343
    %v1837 = vsel %vm1836, %v1834, %v1831
    %v1838 = vadd.f32 %v790, 1.0
    %v1839 = vlog2.pop %v1838
    %v1840 = vmul.f32 %v1839, 0.6931472
    %v1841 = vmul.f32 -0.5, %v790
    %v1842 = vadd.f32 %v1841, 1.0
    %v1843 = vmul.f32 %v1842, %v790
    %v1844 = vand.u32 2147483647, %v790
    %vm1845 = vcmp.lt.f32.partialorder %v1844, 0.0004427343
    %v1846 = vsel %vm1845, %v1843, %v1840
    %v1847 = vadd.f32 %v792, 1.0
    %v1848 = vlog2.pop %v1847
    %v1849 = vmul.f32 %v1848, 0.6931472
    %v1850 = vmul.f32 -0.5, %v792
    %v1851 = vadd.f32 %v1850, 1.0
    %v1852 = vmul.f32 %v1851, %v792
    %v1853 = vand.u32 2147483647, %v792
    %vm1854 = vcmp.lt.f32.partialorder %v1853, 0.0004427343
    %v1855 = vsel %vm1854, %v1852, %v1849
    %v1856 = vadd.f32 %v794, 1.0
    %v1857 = vlog2.pop %v1856
    %v1858 = vmul.f32 %v1857, 0.6931472
    %v1859 = vmul.f32 -0.5, %v794
    %v1860 = vadd.f32 %v1859, 1.0
    %v1861 = vmul.f32 %v1860, %v794
    %v1862 = vand.u32 2147483647, %v794
    %vm1863 = vcmp.lt.f32.partialorder %v1862, 0.0004427343
    %v1864 = vsel %vm1863, %v1861, %v1858
    %v1865 = vadd.f32 %v796, 1.0
    %v1866 = vlog2.pop %v1865
    %v1867 = vmul.f32 %v1866, 0.6931472
    %v1868 = vmul.f32 -0.5, %v796
    %v1869 = vadd.f32 %v1868, 1.0
    %v1870 = vmul.f32 %v1869, %v796
    %v1871 = vand.u32 2147483647, %v796
    %vm1872 = vcmp.lt.f32.partialorder %v1871, 0.0004427343
    %v1873 = vsel %vm1872, %v1870, %v1867
    %v1874 = vadd.f32 %v798, 1.0
    %v1875 = vlog2.pop %v1874
    %v1876 = vmul.f32 %v1875, 0.6931472
    %v1877 = vmul.f32 -0.5, %v798
    %v1878 = vadd.f32 %v1877, 1.0
    %v1879 = vmul.f32 %v1878, %v798
    %v1880 = vand.u32 2147483647, %v798
    %vm1881 = vcmp.lt.f32.partialorder %v1880, 0.0004427343
    %v1882 = vsel %vm1881, %v1879, %v1876
    %v1883 = vadd.f32 %v800, 1.0
    %v1884 = vlog2.pop %v1883
    %v1885 = vmul.f32 %v1884, 0.6931472
    %v1886 = vmul.f32 -0.5, %v800
    %v1887 = vadd.f32 %v1886, 1.0
    %v1888 = vmul.f32 %v1887, %v800
    %v1889 = vand.u32 2147483647, %v800
    %vm1890 = vcmp.lt.f32.partialorder %v1889, 0.0004427343
    %v1891 = vsel %vm1890, %v1888, %v1885
    %v1892 = vadd.f32 %v802, 1.0
    %v1893 = vlog2.pop %v1892
    %v1894 = vmul.f32 %v1893, 0.6931472
    %v1895 = vmul.f32 -0.5, %v802
    %v1896 = vadd.f32 %v1895, 1.0
    %v1897 = vmul.f32 %v1896, %v802
    %v1898 = vand.u32 2147483647, %v802
    %vm1899 = vcmp.lt.f32.partialorder %v1898, 0.0004427343
    %v1900 = vsel %vm1899, %v1897, %v1894
    %v1901 = vadd.f32 %v804, 1.0
    %v1902 = vlog2.pop %v1901
    %v1903 = vmul.f32 %v1902, 0.6931472
    %v1904 = vmul.f32 -0.5, %v804
    %v1905 = vadd.f32 %v1904, 1.0
    %v1906 = vmul.f32 %v1905, %v804
    %v1907 = vand.u32 2147483647, %v804
    %vm1908 = vcmp.lt.f32.partialorder %v1907, 0.0004427343
    %v1909 = vsel %vm1908, %v1906, %v1903
    %v1910 = vadd.f32 %v806, 1.0
    %v1911 = vlog2.pop %v1910
    %v1912 = vmul.f32 %v1911, 0.6931472
    %v1913 = vmul.f32 -0.5, %v806
    %v1914 = vadd.f32 %v1913, 1.0
    %v1915 = vmul.f32 %v1914, %v806
    %v1916 = vand.u32 2147483647, %v806
    %vm1917 = vcmp.lt.f32.partialorder %v1916, 0.0004427343
    %v1918 = vsel %vm1917, %v1915, %v1912
    %v1919 = vadd.f32 %v808, 1.0
    %v1920 = vlog2.pop %v1919
    %v1921 = vmul.f32 %v1920, 0.6931472
    %v1922 = vmul.f32 -0.5, %v808
    %v1923 = vadd.f32 %v1922, 1.0
    %v1924 = vmul.f32 %v1923, %v808
    %v1925 = vand.u32 2147483647, %v808
    %vm1926 = vcmp.lt.f32.partialorder %v1925, 0.0004427343
    %v1927 = vsel %vm1926, %v1924, %v1921
    %v1928 = vadd.f32 %v810, 1.0
    %v1929 = vlog2.pop %v1928
    %v1930 = vmul.f32 %v1929, 0.6931472
    %v1931 = vmul.f32 -0.5, %v810
    %v1932 = vadd.f32 %v1931, 1.0
    %v1933 = vmul.f32 %v1932, %v810
    %v1934 = vand.u32 2147483647, %v810
    %vm1935 = vcmp.lt.f32.partialorder %v1934, 0.0004427343
    %v1936 = vsel %vm1935, %v1933, %v1930
    %v1937 = vadd.f32 %v812, 1.0
    %v1938 = vlog2.pop %v1937
    %v1939 = vmul.f32 %v1938, 0.6931472
    %v1940 = vmul.f32 -0.5, %v812
    %v1941 = vadd.f32 %v1940, 1.0
    %v1942 = vmul.f32 %v1941, %v812
    %v1943 = vand.u32 2147483647, %v812
    %vm1944 = vcmp.lt.f32.partialorder %v1943, 0.0004427343
    %v1945 = vsel %vm1944, %v1942, %v1939
    %v1946 = vadd.f32 %v814, 1.0
    %v1947 = vlog2.pop %v1946
    %v1948 = vmul.f32 %v1947, 0.6931472
    %v1949 = vmul.f32 -0.5, %v814
    %v1950 = vadd.f32 %v1949, 1.0
    %v1951 = vmul.f32 %v1950, %v814
    %v1952 = vand.u32 2147483647, %v814
    %vm1953 = vcmp.lt.f32.partialorder %v1952, 0.0004427343
    %v1954 = vsel %vm1953, %v1951, %v1948
    %v1955 = vadd.f32 %v816, 1.0
    %v1956 = vlog2.pop %v1955
    %v1957 = vmul.f32 %v1956, 0.6931472
    %v1958 = vmul.f32 -0.5, %v816
    %v1959 = vadd.f32 %v1958, 1.0
    %v1960 = vmul.f32 %v1959, %v816
    %v1961 = vand.u32 2147483647, %v816
    %vm1962 = vcmp.lt.f32.partialorder %v1961, 0.0004427343
    %v1963 = vsel %vm1962, %v1960, %v1957
    %v1964 = vadd.f32 %v818, 1.0
    %v1965 = vlog2.pop %v1964
    %v1966 = vmul.f32 %v1965, 0.6931472
    %v1967 = vmul.f32 -0.5, %v818
    %v1968 = vadd.f32 %v1967, 1.0
    %v1969 = vmul.f32 %v1968, %v818
    %v1970 = vand.u32 2147483647, %v818
    %vm1971 = vcmp.lt.f32.partialorder %v1970, 0.0004427343
    %v1972 = vsel %vm1971, %v1969, %v1966
    %v1973 = vadd.f32 %v820, 1.0
    %v1974 = vlog2.pop %v1973
    %v1975 = vmul.f32 %v1974, 0.6931472
    %v1976 = vmul.f32 -0.5, %v820
    %v1977 = vadd.f32 %v1976, 1.0
    %v1978 = vmul.f32 %v1977, %v820
    %v1979 = vand.u32 2147483647, %v820
    %vm1980 = vcmp.lt.f32.partialorder %v1979, 0.0004427343
    %v1981 = vsel %vm1980, %v1978, %v1975
    %v1982 = vadd.f32 %v822, 1.0
    %v1983 = vlog2.pop %v1982
    %v1984 = vmul.f32 %v1983, 0.6931472
    %v1985 = vmul.f32 -0.5, %v822
    %v1986 = vadd.f32 %v1985, 1.0
    %v1987 = vmul.f32 %v1986, %v822
    %v1988 = vand.u32 2147483647, %v822
    %vm1989 = vcmp.lt.f32.partialorder %v1988, 0.0004427343
    %v1990 = vsel %vm1989, %v1987, %v1984
    %v1991 = vadd.f32 %v824, 1.0
    %v1992 = vlog2.pop %v1991
    %v1993 = vmul.f32 %v1992, 0.6931472
    %v1994 = vmul.f32 -0.5, %v824
    %v1995 = vadd.f32 %v1994, 1.0
    %v1996 = vmul.f32 %v1995, %v824
    %v1997 = vand.u32 2147483647, %v824
    %vm1998 = vcmp.lt.f32.partialorder %v1997, 0.0004427343
    %v1999 = vsel %vm1998, %v1996, %v1993
    %v2000 = vadd.f32 %v826, 1.0
    %v2001 = vlog2.pop %v2000
    %v2002 = vmul.f32 %v2001, 0.6931472
    %v2003 = vmul.f32 -0.5, %v826
    %v2004 = vadd.f32 %v2003, 1.0
    %v2005 = vmul.f32 %v2004, %v826
    %v2006 = vand.u32 2147483647, %v826
    %vm2007 = vcmp.lt.f32.partialorder %v2006, 0.0004427343
    %v2008 = vsel %vm2007, %v2005, %v2002
    %v2009 = vadd.f32 %v828, 1.0
    %v2010 = vlog2.pop %v2009
    %v2011 = vmul.f32 %v2010, 0.6931472
    %v2012 = vmul.f32 -0.5, %v828
    %v2013 = vadd.f32 %v2012, 1.0
    %v2014 = vmul.f32 %v2013, %v828
    %v2015 = vand.u32 2147483647, %v828
    %vm2016 = vcmp.lt.f32.partialorder %v2015, 0.0004427343
    %v2017 = vsel %vm2016, %v2014, %v2011
    %v2018 = vadd.f32 %v830, 1.0
    %v2019 = vlog2.pop %v2018
    %v2020 = vmul.f32 %v2019, 0.6931472
    %v2021 = vmul.f32 -0.5, %v830
    %v2022 = vadd.f32 %v2021, 1.0
    %v2023 = vmul.f32 %v2022, %v830
    %v2024 = vand.u32 2147483647, %v830
    %vm2025 = vcmp.lt.f32.partialorder %v2024, 0.0004427343
    %v2026 = vsel %vm2025, %v2023, %v2020
    %v2027 = vadd.f32 %v832, 1.0
    %v2028 = vlog2.pop %v2027
    %v2029 = vmul.f32 %v2028, 0.6931472
    %v2030 = vmul.f32 -0.5, %v832
    %v2031 = vadd.f32 %v2030, 1.0
    %v2032 = vmul.f32 %v2031, %v832
    %v2033 = vand.u32 2147483647, %v832
    %vm2034 = vcmp.lt.f32.partialorder %v2033, 0.0004427343
    %v2035 = vsel %vm2034, %v2032, %v2029
    %v2036 = vadd.f32 %v834, 1.0
    %v2037 = vlog2.pop %v2036
    %v2038 = vmul.f32 %v2037, 0.6931472
    %v2039 = vmul.f32 -0.5, %v834
    %v2040 = vadd.f32 %v2039, 1.0
    %v2041 = vmul.f32 %v2040, %v834
    %v2042 = vand.u32 2147483647, %v834
    %vm2043 = vcmp.lt.f32.partialorder %v2042, 0.0004427343
    %v2044 = vsel %vm2043, %v2041, %v2038
    %v2045 = vadd.f32 %v836, 1.0
    %v2046 = vlog2.pop %v2045
    %v2047 = vmul.f32 %v2046, 0.6931472
    %v2048 = vmul.f32 -0.5, %v836
    %v2049 = vadd.f32 %v2048, 1.0
    %v2050 = vmul.f32 %v2049, %v836
    %v2051 = vand.u32 2147483647, %v836
    %vm2052 = vcmp.lt.f32.partialorder %v2051, 0.0004427343
    %v2053 = vsel %vm2052, %v2050, %v2047
    %v2054 = vadd.f32 %v838, 1.0
    %v2055 = vlog2.pop %v2054
    %v2056 = vmul.f32 %v2055, 0.6931472
    %v2057 = vmul.f32 -0.5, %v838
    %v2058 = vadd.f32 %v2057, 1.0
    %v2059 = vmul.f32 %v2058, %v838
    %v2060 = vand.u32 2147483647, %v838
    %vm2061 = vcmp.lt.f32.partialorder %v2060, 0.0004427343
    %v2062 = vsel %vm2061, %v2059, %v2056
    %v2063 = vadd.f32 %v159, %v847
    %v2064 = vadd.f32 %v160, %v856
    %v2065 = vadd.f32 %v161, %v865
    %v2066 = vadd.f32 %v162, %v874
    %v2067 = vadd.f32 %v163, %v883
    %v2068 = vadd.f32 %v164, %v892
    %v2069 = vadd.f32 %v165, %v901
    %v2070 = vadd.f32 %v166, %v910
    %v2071 = vadd.f32 %v167, %v919
    %v2072 = vadd.f32 %v168, %v928
    %v2073 = vadd.f32 %v169, %v937
    %v2074 = vadd.f32 %v170, %v946
    %v2075 = vadd.f32 %v171, %v955
    %v2076 = vadd.f32 %v172, %v964
    %v2077 = vadd.f32 %v173, %v973
    %v2078 = vadd.f32 %v174, %v982
    %v2079 = vadd.f32 %v175, %v991
    %v2080 = vadd.f32 %v176, %v1000
    %v2081 = vadd.f32 %v177, %v1009
    %v2082 = vadd.f32 %v178, %v1018
    %v2083 = vadd.f32 %v179, %v1027
    %v2084 = vadd.f32 %v180, %v1036
    %v2085 = vadd.f32 %v181, %v1045
    %v2086 = vadd.f32 %v182, %v1054
    %v2087 = vadd.f32 %v183, %v1063
    %v2088 = vadd.f32 %v184, %v1072
    %v2089 = vadd.f32 %v185, %v1081
    %v2090 = vadd.f32 %v186, %v1090
    %v2091 = vadd.f32 %v187, %v1099
    %v2092 = vadd.f32 %v188, %v1108
    %v2093 = vadd.f32 %v189, %v1117
    %v2094 = vadd.f32 %v190, %v1126
    %v2095 = vadd.f32 %v191, %v1135
    %v2096 = vadd.f32 %v192, %v1144
    %v2097 = vadd.f32 %v193, %v1153
    %v2098 = vadd.f32 %v194, %v1162
    %v2099 = vadd.f32 %v195, %v1171
    %v2100 = vadd.f32 %v196, %v1180
    %v2101 = vadd.f32 %v197, %v1189
    %v2102 = vadd.f32 %v198, %v1198
    %v2103 = vadd.f32 %v199, %v1207
    %v2104 = vadd.f32 %v200, %v1216
    %v2105 = vadd.f32 %v201, %v1225
    %v2106 = vadd.f32 %v202, %v1234
    %v2107 = vadd.f32 %v203, %v1243
    %v2108 = vadd.f32 %v204, %v1252
    %v2109 = vadd.f32 %v205, %v1261
    %v2110 = vadd.f32 %v206, %v1270
    %v2111 = vadd.f32 %v207, %v1279
    %v2112 = vadd.f32 %v208, %v1288
    %v2113 = vadd.f32 %v209, %v1297
    %v2114 = vadd.f32 %v210, %v1306
    %v2115 = vadd.f32 %v211, %v1315
    %v2116 = vadd.f32 %v212, %v1324
    %v2117 = vadd.f32 %v213, %v1333
    %v2118 = vadd.f32 %v214, %v1342
    %v2119 = vadd.f32 %v215, %v1351
    %v2120 = vadd.f32 %v216, %v1360
    %v2121 = vadd.f32 %v217, %v1369
    %v2122 = vadd.f32 %v218, %v1378
    %v2123 = vadd.f32 %v219, %v1387
    %v2124 = vadd.f32 %v220, %v1396
    %v2125 = vadd.f32 %v221, %v1405
    %v2126 = vadd.f32 %v222, %v1414
    %v2127 = vadd.f32 %v223, %v1423
    %v2128 = vadd.f32 %v224, %v1432
    %v2129 = vadd.f32 %v225, %v1441
    %v2130 = vadd.f32 %v226, %v1450
    %v2131 = vadd.f32 %v227, %v1459
    %v2132 = vadd.f32 %v228, %v1468
    %v2133 = vadd.f32 %v229, %v1477
    %v2134 = vadd.f32 %v230, %v1486
    %v2135 = vadd.f32 %v231, %v1495
    %v2136 = vadd.f32 %v232, %v1504
    %v2137 = vadd.f32 %v233, %v1513
    %v2138 = vadd.f32 %v234, %v1522
    %v2139 = vadd.f32 %v235, %v1531
    %v2140 = vadd.f32 %v236, %v1540
    %v2141 = vadd.f32 %v237, %v1549
    %v2142 = vadd.f32 %v238, %v1558
    %v2143 = vadd.f32 %v239, %v1567
    %v2144 = vadd.f32 %v240, %v1576
    %v2145 = vadd.f32 %v241, %v1585
    %v2146 = vadd.f32 %v242, %v1594
    %v2147 = vadd.f32 %v243, %v1603
    %v2148 = vadd.f32 %v244, %v1612
    %v2149 = vadd.f32 %v245, %v1621
    %v2150 = vadd.f32 %v246, %v1630
    %v2151 = vadd.f32 %v247, %v1639
    %v2152 = vadd.f32 %v248, %v1648
    %v2153 = vadd.f32 %v249, %v1657
    %v2154 = vadd.f32 %v250, %v1666
    %v2155 = vadd.f32 %v251, %v1675
    %v2156 = vadd.f32 %v252, %v1684
    %v2157 = vadd.f32 %v253, %v1693
    %v2158 = vadd.f32 %v254, %v1702
    %v2159 = vadd.f32 %v255, %v1711
    %v2160 = vadd.f32 %v256, %v1720
    %v2161 = vadd.f32 %v257, %v1729
    %v2162 = vadd.f32 %v258, %v1738
    %v2163 = vadd.f32 %v259, %v1747
    %v2164 = vadd.f32 %v260, %v1756
    %v2165 = vadd.f32 %v261, %v1765
    %v2166 = vadd.f32 %v262, %v1774
    %v2167 = vadd.f32 %v263, %v1783
    %v2168 = vadd.f32 %v264, %v1792
    %v2169 = vadd.f32 %v265, %v1801
    %v2170 = vadd.f32 %v266, %v1810
    %v2171 = vadd.f32 %v267, %v1819
    %v2172 = vadd.f32 %v268, %v1828
    %v2173 = vadd.f32 %v269, %v1837
    %v2174 = vadd.f32 %v270, %v1846
    %v2175 = vadd.f32 %v271, %v1855
    %v2176 = vadd.f32 %v272, %v1864
    %v2177 = vadd.f32 %v273, %v1873
    %v2178 = vadd.f32 %v274, %v1882
    %v2179 = vadd.f32 %v275, %v1891
    %v2180 = vadd.f32 %v276, %v1900
    %v2181 = vadd.f32 %v277, %v1909
    %v2182 = vadd.f32 %v278, %v1918
    %v2183 = vadd.f32 %v279, %v1927
    %v2184 = vadd.f32 %v280, %v1936
    %v2185 = vadd.f32 %v281, %v1945
    %v2186 = vadd.f32 %v282, %v1954
    %v2187 = vadd.f32 %v283, %v1963
    %v2188 = vadd.f32 %v284, %v1972
    %v2189 = vadd.f32 %v285, %v1981
    %v2190 = vadd.f32 %v286, %v1990
    %v2191 = vadd.f32 %v287, %v1999
    %v2192 = vadd.f32 %v288, %v2008
    %v2193 = vadd.f32 %v289, %v2017
    %v2194 = vadd.f32 %v290, %v2026
    %v2195 = vadd.f32 %v291, %v2035
    %v2196 = vadd.f32 %v292, %v2044
    %v2197 = vadd.f32 %v293, %v2053
    %v2198 = vadd.f32 %v294, %v2062
    %v2199 = vsub.f32 %v2063, 0.6931472
    %v2200 = vsub.f32 %v2064, 0.6931472
    %v2201 = vsub.f32 %v2065, 0.6931472
    %v2202 = vsub.f32 %v2066, 0.6931472
    %v2203 = vsub.f32 %v2067, 0.6931472
    %v2204 = vsub.f32 %v2068, 0.6931472
    %v2205 = vsub.f32 %v2069, 0.6931472
    %v2206 = vsub.f32 %v2070, 0.6931472
    %v2207 = vsub.f32 %v2071, 0.6931472
    %v2208 = vsub.f32 %v2072, 0.6931472
    %v2209 = vsub.f32 %v2073, 0.6931472
    %v2210 = vsub.f32 %v2074, 0.6931472
    %v2211 = vsub.f32 %v2075, 0.6931472
    %v2212 = vsub.f32 %v2076, 0.6931472
    %v2213 = vsub.f32 %v2077, 0.6931472
    %v2214 = vsub.f32 %v2078, 0.6931472
    %v2215 = vsub.f32 %v2079, 0.6931472
    %v2216 = vsub.f32 %v2080, 0.6931472
    %v2217 = vsub.f32 %v2081, 0.6931472
    %v2218 = vsub.f32 %v2082, 0.6931472
    %v2219 = vsub.f32 %v2083, 0.6931472
    %v2220 = vsub.f32 %v2084, 0.6931472
    %v2221 = vsub.f32 %v2085, 0.6931472
    %v2222 = vsub.f32 %v2086, 0.6931472
    %v2223 = vsub.f32 %v2087, 0.6931472
    %v2224 = vsub.f32 %v2088, 0.6931472
    %v2225 = vsub.f32 %v2089, 0.6931472
    %v2226 = vsub.f32 %v2090, 0.6931472
    %v2227 = vsub.f32 %v2091, 0.6931472
    %v2228 = vsub.f32 %v2092, 0.6931472
    %v2229 = vsub.f32 %v2093, 0.6931472
    %v2230 = vsub.f32 %v2094, 0.6931472
    %v2231 = vsub.f32 %v2095, 0.6931472
    %v2232 = vsub.f32 %v2096, 0.6931472
    %v2233 = vsub.f32 %v2097, 0.6931472
    %v2234 = vsub.f32 %v2098, 0.6931472
    %v2235 = vsub.f32 %v2099, 0.6931472
    %v2236 = vsub.f32 %v2100, 0.6931472
    %v2237 = vsub.f32 %v2101, 0.6931472
    %v2238 = vsub.f32 %v2102, 0.6931472
    %v2239 = vsub.f32 %v2103, 0.6931472
    %v2240 = vsub.f32 %v2104, 0.6931472
    %v2241 = vsub.f32 %v2105, 0.6931472
    %v2242 = vsub.f32 %v2106, 0.6931472
    %v2243 = vsub.f32 %v2107, 0.6931472
    %v2244 = vsub.f32 %v2108, 0.6931472
    %v2245 = vsub.f32 %v2109, 0.6931472
    %v2246 = vsub.f32 %v2110, 0.6931472
    %v2247 = vsub.f32 %v2111, 0.6931472
    %v2248 = vsub.f32 %v2112, 0.6931472
    %v2249 = vsub.f32 %v2113, 0.6931472
    %v2250 = vsub.f32 %v2114, 0.6931472
    %v2251 = vsub.f32 %v2115, 0.6931472
    %v2252 = vsub.f32 %v2116, 0.6931472
    %v2253 = vsub.f32 %v2117, 0.6931472
    %v2254 = vsub.f32 %v2118, 0.6931472
    %v2255 = vsub.f32 %v2119, 0.6931472
    %v2256 = vsub.f32 %v2120, 0.6931472
    %v2257 = vsub.f32 %v2121, 0.6931472
    %v2258 = vsub.f32 %v2122, 0.6931472
    %v2259 = vsub.f32 %v2123, 0.6931472
    %v2260 = vsub.f32 %v2124, 0.6931472
    %v2261 = vsub.f32 %v2125, 0.6931472
    %v2262 = vsub.f32 %v2126, 0.6931472
    %v2263 = vsub.f32 %v2127, 0.6931472
    %v2264 = vsub.f32 %v2128, 0.6931472
    %v2265 = vsub.f32 %v2129, 0.6931472
    %v2266 = vsub.f32 %v2130, 0.6931472
    %v2267 = vsub.f32 %v2131, 0.6931472
    %v2268 = vsub.f32 %v2132, 0.6931472
    %v2269 = vsub.f32 %v2133, 0.6931472
    %v2270 = vsub.f32 %v2134, 0.6931472
    %v2271 = vsub.f32 %v2135, 0.6931472
    %v2272 = vsub.f32 %v2136, 0.6931472
    %v2273 = vsub.f32 %v2137, 0.6931472
    %v2274 = vsub.f32 %v2138, 0.6931472
    %v2275 = vsub.f32 %v2139, 0.6931472
    %v2276 = vsub.f32 %v2140, 0.6931472
    %v2277 = vsub.f32 %v2141, 0.6931472
    %v2278 = vsub.f32 %v2142, 0.6931472
    %v2279 = vsub.f32 %v2143, 0.6931472
    %v2280 = vsub.f32 %v2144, 0.6931472
    %v2281 = vsub.f32 %v2145, 0.6931472
    %v2282 = vsub.f32 %v2146, 0.6931472
    %v2283 = vsub.f32 %v2147, 0.6931472
    %v2284 = vsub.f32 %v2148, 0.6931472
    %v2285 = vsub.f32 %v2149, 0.6931472
    %v2286 = vsub.f32 %v2150, 0.6931472
    %v2287 = vsub.f32 %v2151, 0.6931472
    %v2288 = vsub.f32 %v2152, 0.6931472
    %v2289 = vsub.f32 %v2153, 0.6931472
    %v2290 = vsub.f32 %v2154, 0.6931472
    %v2291 = vsub.f32 %v2155, 0.6931472
    %v2292 = vsub.f32 %v2156, 0.6931472
    %v2293 = vsub.f32 %v2157, 0.6931472
    %v2294 = vsub.f32 %v2158, 0.6931472
    %v2295 = vsub.f32 %v2159, 0.6931472
    %v2296 = vsub.f32 %v2160, 0.6931472
    %v2297 = vsub.f32 %v2161, 0.6931472
    %v2298 = vsub.f32 %v2162, 0.6931472
    %v2299 = vsub.f32 %v2163, 0.6931472
    %v2300 = vsub.f32 %v2164, 0.6931472
    %v2301 = vsub.f32 %v2165, 0.6931472
    %v2302 = vsub.f32 %v2166, 0.6931472
    %v2303 = vsub.f32 %v2167, 0.6931472
    %v2304 = vsub.f32 %v2168, 0.6931472
    %v2305 = vsub.f32 %v2169, 0.6931472
    %v2306 = vsub.f32 %v2170, 0.6931472
    %v2307 = vsub.f32 %v2171, 0.6931472
    %v2308 = vsub.f32 %v2172, 0.6931472
    %v2309 = vsub.f32 %v2173, 0.6931472
    %v2310 = vsub.f32 %v2174, 0.6931472
    %v2311 = vsub.f32 %v2175, 0.6931472
    %v2312 = vsub.f32 %v2176, 0.6931472
    %v2313 = vsub.f32 %v2177, 0.6931472
    %v2314 = vsub.f32 %v2178, 0.6931472
    %v2315 = vsub.f32 %v2179, 0.6931472
    %v2316 = vsub.f32 %v2180, 0.6931472
    %v2317 = vsub.f32 %v2181, 0.6931472
    %v2318 = vsub.f32 %v2182, 0.6931472
    %v2319 = vsub.f32 %v2183, 0.6931472
    %v2320 = vsub.f32 %v2184, 0.6931472
    %v2321 = vsub.f32 %v2185, 0.6931472
    %v2322 = vsub.f32 %v2186, 0.6931472
    %v2323 = vsub.f32 %v2187, 0.6931472
    %v2324 = vsub.f32 %v2188, 0.6931472
    %v2325 = vsub.f32 %v2189, 0.6931472
    %v2326 = vsub.f32 %v2190, 0.6931472
    %v2327 = vsub.f32 %v2191, 0.6931472
    %v2328 = vsub.f32 %v2192, 0.6931472
    %v2329 = vsub.f32 %v2193, 0.6931472
    %v2330 = vsub.f32 %v2194, 0.6931472
    %v2331 = vsub.f32 %v2195, 0.6931472
    %v2332 = vsub.f32 %v2196, 0.6931472
    %v2333 = vsub.f32 %v2197, 0.6931472
    %v2334 = vsub.f32 %v2198, 0.6931472
    %2335 = vst [vmem:[#allocation5] sm:$0xff] %v2199
    %2336 = vst [vmem:[#allocation5 + $0x8] sm:$0xff] %v2200
    %2337 = vst [vmem:[#allocation5 + $0x10] sm:$0xff] %v2201
    %2338 = vst [vmem:[#allocation5 + $0x18] sm:$0xff] %v2202
    %2339 = vst [vmem:[#allocation5 + $0x20] sm:$0xff] %v2203
    %2340 = vst [vmem:[#allocation5 + $0x28] sm:$0xff] %v2204
    %2341 = vst [vmem:[#allocation5 + $0x30] sm:$0xff] %v2205
    %2342 = vst [vmem:[#allocation5 + $0x38] sm:$0xff] %v2206
    %2343 = vst [vmem:[#allocation5 + $0x40] sm:$0xff] %v2207
    %2344 = vst [vmem:[#allocation5 + $0x48] sm:$0xff] %v2208
    %2345 = vst [vmem:[#allocation5 + $0x50] sm:$0xff] %v2209
    %2346 = vst [vmem:[#allocation5 + $0x58] sm:$0xff] %v2210
    %2347 = vst [vmem:[#allocation5 + $0x60] sm:$0xff] %v2211
    %2348 = vst [vmem:[#allocation5 + $0x68] sm:$0xff] %v2212
    %2349 = vst [vmem:[#allocation5 + $0x70] sm:$0xff] %v2213
    %2350 = vst [vmem:[#allocation5 + $0x78] sm:$0xff] %v2214
    %2351 = vst [vmem:[#allocation5 + $0x80] sm:$0xff] %v2215
    %2352 = vst [vmem:[#allocation5 + $0x88] sm:$0xff] %v2216
    %2353 = vst [vmem:[#allocation5 + $0x90] sm:$0xff] %v2217
    %2354 = vst [vmem:[#allocation5 + $0x98] sm:$0xff] %v2218
    %2355 = vst [vmem:[#allocation5 + $0xa0] sm:$0xff] %v2219
    %2356 = vst [vmem:[#allocation5 + $0xa8] sm:$0xff] %v2220
    %2357 = vst [vmem:[#allocation5 + $0xb0] sm:$0xff] %v2221
    %2358 = vst [vmem:[#allocation5 + $0xb8] sm:$0xff] %v2222
    %2359 = vst [vmem:[#allocation5 + $0xc0] sm:$0xff] %v2223
    %2360 = vst [vmem:[#allocation5 + $0xc8] sm:$0xff] %v2224
    %2361 = vst [vmem:[#allocation5 + $0xd0] sm:$0xff] %v2225
    %2362 = vst [vmem:[#allocation5 + $0xd8] sm:$0xff] %v2226
    %2363 = vst [vmem:[#allocation5 + $0xe0] sm:$0xff] %v2227
    %2364 = vst [vmem:[#allocation5 + $0xe8] sm:$0xff] %v2228
    %2365 = vst [vmem:[#allocation5 + $0xf0] sm:$0xff] %v2229
    %2366 = vst [vmem:[#allocation5 + $0xf8] sm:$0xff] %v2230
    %2367 = vst [vmem:[#allocation5 + $0x100] sm:$0xff] %v2231
    %2368 = vst [vmem:[#allocation5 + $0x108] sm:$0xff] %v2232
    %2369 = vst [vmem:[#allocation5 + $0x110] sm:$0xff] %v2233
    %2370 = vst [vmem:[#allocation5 + $0x118] sm:$0xff] %v2234
    %2371 = vst [vmem:[#allocation5 + $0x120] sm:$0xff] %v2235
    %2372 = vst [vmem:[#allocation5 + $0x128] sm:$0xff] %v2236
    %2373 = vst [vmem:[#allocation5 + $0x130] sm:$0xff] %v2237
    %2374 = vst [vmem:[#allocation5 + $0x138] sm:$0xff] %v2238
    %2375 = vst [vmem:[#allocation5 + $0x140] sm:$0xff] %v2239
    %2376 = vst [vmem:[#allocation5 + $0x148] sm:$0xff] %v2240
    %2377 = vst [vmem:[#allocation5 + $0x150] sm:$0xff] %v2241
    %2378 = vst [vmem:[#allocation5 + $0x158] sm:$0xff] %v2242
    %2379 = vst [vmem:[#allocation5 + $0x160] sm:$0xff] %v2243
    %2380 = vst [vmem:[#allocation5 + $0x168] sm:$0xff] %v2244
    %2381 = vst [vmem:[#allocation5 + $0x170] sm:$0xff] %v2245
    %2382 = vst [vmem:[#allocation5 + $0x178] sm:$0xff] %v2246
    %2383 = vst [vmem:[#allocation5 + $0x180] sm:$0xff] %v2247
    %2384 = vst [vmem:[#allocation5 + $0x188] sm:$0xff] %v2248
    %2385 = vst [vmem:[#allocation5 + $0x190] sm:$0xff] %v2249
    %2386 = vst [vmem:[#allocation5 + $0x198] sm:$0xff] %v2250
    %2387 = vst [vmem:[#allocation5 + $0x1a0] sm:$0xff] %v2251
    %2388 = vst [vmem:[#allocation5 + $0x1a8] sm:$0xff] %v2252
    %2389 = vst [vmem:[#allocation5 + $0x1b0] sm:$0xff] %v2253
    %2390 = vst [vmem:[#allocation5 + $0x1b8] sm:$0xff] %v2254
    %2391 = vst [vmem:[#allocation5 + $0x1c0] sm:$0xff] %v2255
    %2392 = vst [vmem:[#allocation5 + $0x1c8] sm:$0xff] %v2256
    %2393 = vst [vmem:[#allocation5 + $0x1d0] sm:$0xff] %v2257
    %2394 = vst [vmem:[#allocation5 + $0x1d8] sm:$0xff] %v2258
    %2395 = vst [vmem:[#allocation5 + $0x1e0] sm:$0xff] %v2259
    %2396 = vst [vmem:[#allocation5 + $0x1e8] sm:$0xff] %v2260
    %2397 = vst [vmem:[#allocation5 + $0x1f0] sm:$0xff] %v2261
    %2398 = vst [vmem:[#allocation5 + $0x1f8] sm:$0xff] %v2262
    %2399 = vst [vmem:[#allocation5 + $0x200] sm:$0xff] %v2263
    %2400 = vst [vmem:[#allocation5 + $0x208] sm:$0xff] %v2264
    %2401 = vst [vmem:[#allocation5 + $0x210] sm:$0xff] %v2265
    %2402 = vst [vmem:[#allocation5 + $0x218] sm:$0xff] %v2266
    %2403 = vst [vmem:[#allocation5 + $0x220] sm:$0xff] %v2267
    %2404 = vst [vmem:[#allocation5 + $0x228] sm:$0xff] %v2268
    %2405 = vst [vmem:[#allocation5 + $0x230] sm:$0xff] %v2269
    %2406 = vst [vmem:[#allocation5 + $0x238] sm:$0xff] %v2270
    %2407 = vst [vmem:[#allocation5 + $0x240] sm:$0xff] %v2271
    %2408 = vst [vmem:[#allocation5 + $0x248] sm:$0xff] %v2272
    %2409 = vst [vmem:[#allocation5 + $0x250] sm:$0xff] %v2273
    %2410 = vst [vmem:[#allocation5 + $0x258] sm:$0xff] %v2274
    %2411 = vst [vmem:[#allocation5 + $0x260] sm:$0xff] %v2275
    %2412 = vst [vmem:[#allocation5 + $0x268] sm:$0xff] %v2276
    %2413 = vst [vmem:[#allocation5 + $0x270] sm:$0xff] %v2277
    %2414 = vst [vmem:[#allocation5 + $0x278] sm:$0xff] %v2278
    %2415 = vst [vmem:[#allocation5 + $0x280] sm:$0xff] %v2279
    %2416 = vst [vmem:[#allocation5 + $0x288] sm:$0xff] %v2280
    %2417 = vst [vmem:[#allocation5 + $0x290] sm:$0xff] %v2281
    %2418 = vst [vmem:[#allocation5 + $0x298] sm:$0xff] %v2282
    %2419 = vst [vmem:[#allocation5 + $0x2a0] sm:$0xff] %v2283
    %2420 = vst [vmem:[#allocation5 + $0x2a8] sm:$0xff] %v2284
    %2421 = vst [vmem:[#allocation5 + $0x2b0] sm:$0xff] %v2285
    %2422 = vst [vmem:[#allocation5 + $0x2b8] sm:$0xff] %v2286
    %2423 = vst [vmem:[#allocation5 + $0x2c0] sm:$0xff] %v2287
    %2424 = vst [vmem:[#allocation5 + $0x2c8] sm:$0xff] %v2288
    %2425 = vst [vmem:[#allocation5 + $0x2d0] sm:$0xff] %v2289
    %2426 = vst [vmem:[#allocation5 + $0x2d8] sm:$0xff] %v2290
    %2427 = vst [vmem:[#allocation5 + $0x2e0] sm:$0xff] %v2291
    %2428 = vst [vmem:[#allocation5 + $0x2e8] sm:$0xff] %v2292
    %2429 = vst [vmem:[#allocation5 + $0x2f0] sm:$0xff] %v2293
    %2430 = vst [vmem:[#allocation5 + $0x2f8] sm:$0xff] %v2294
    %2431 = vst [vmem:[#allocation5 + $0x300] sm:$0xff] %v2295
    %2432 = vst [vmem:[#allocation5 + $0x308] sm:$0xff] %v2296
    %2433 = vst [vmem:[#allocation5 + $0x310] sm:$0xff] %v2297
    %2434 = vst [vmem:[#allocation5 + $0x318] sm:$0xff] %v2298
    %2435 = vst [vmem:[#allocation5 + $0x320] sm:$0xff] %v2299
    %2436 = vst [vmem:[#allocation5 + $0x328] sm:$0xff] %v2300
    %2437 = vst [vmem:[#allocation5 + $0x330] sm:$0xff] %v2301
    %2438 = vst [vmem:[#allocation5 + $0x338] sm:$0xff] %v2302
    %2439 = vst [vmem:[#allocation5 + $0x340] sm:$0xff] %v2303
    %2440 = vst [vmem:[#allocation5 + $0x348] sm:$0xff] %v2304
    %2441 = vst [vmem:[#allocation5 + $0x350] sm:$0xff] %v2305
    %2442 = vst [vmem:[#allocation5 + $0x358] sm:$0xff] %v2306
    %2443 = vst [vmem:[#allocation5 + $0x360] sm:$0xff] %v2307
    %2444 = vst [vmem:[#allocation5 + $0x368] sm:$0xff] %v2308
    %2445 = vst [vmem:[#allocation5 + $0x370] sm:$0xff] %v2309
    %2446 = vst [vmem:[#allocation5 + $0x378] sm:$0xff] %v2310
    %2447 = vst [vmem:[#allocation5 + $0x380] sm:$0xff] %v2311
    %2448 = vst [vmem:[#allocation5 + $0x388] sm:$0xff] %v2312
    %2449 = vst [vmem:[#allocation5 + $0x390] sm:$0xff] %v2313
    %2450 = vst [vmem:[#allocation5 + $0x398] sm:$0xff] %v2314
    %2451 = vst [vmem:[#allocation5 + $0x3a0] sm:$0xff] %v2315
    %2452 = vst [vmem:[#allocation5 + $0x3a8] sm:$0xff] %v2316
    %2453 = vst [vmem:[#allocation5 + $0x3b0] sm:$0xff] %v2317
    %2454 = vst [vmem:[#allocation5 + $0x3b8] sm:$0xff] %v2318
    %2455 = vst [vmem:[#allocation5 + $0x3c0] sm:$0xff] %v2319
    %2456 = vst [vmem:[#allocation5 + $0x3c8] sm:$0xff] %v2320
    %2457 = vst [vmem:[#allocation5 + $0x3d0] sm:$0xff] %v2321
    %2458 = vst [vmem:[#allocation5 + $0x3d8] sm:$0xff] %v2322
    %2459 = vst [vmem:[#allocation5 + $0x3e0] sm:$0xff] %v2323
    %2460 = vst [vmem:[#allocation5 + $0x3e8] sm:$0xff] %v2324
    %2461 = vst [vmem:[#allocation5 + $0x3f0] sm:$0xff] %v2325
    %2462 = vst [vmem:[#allocation5 + $0x3f8] sm:$0xff] %v2326
    %2463 = vst [vmem:[#allocation5 + $0x400] sm:$0xff] %v2327
    %2464 = vst [vmem:[#allocation5 + $0x408] sm:$0xff] %v2328
    %2465 = vst [vmem:[#allocation5 + $0x410] sm:$0xff] %v2329
    %2466 = vst [vmem:[#allocation5 + $0x418] sm:$0xff] %v2330
    %2467 = vst [vmem:[#allocation5 + $0x420] sm:$0xff] %v2331
    %2468 = vst [vmem:[#allocation5 + $0x428] sm:$0xff] %v2332
    %2469 = vst [vmem:[#allocation5 + $0x430] sm:$0xff] %v2333
    %2470 = vst [vmem:[#allocation5 + $0x438] sm:$0xff] %v2334
    // Predicated region
    $region10: #{tpu_custom_call.1} parent=1 // pred_check
      _
    $region11: #{tpu_custom_call.1} parent=1 // pred_check_branch
      %2472 = sbr.rel (0) target = $region13
    $region12: #{tpu_custom_call.1} parent=1 // pred_region
      %s2474 = ssub.s32 17408, 17408
      %2475 = vsyncadd [#allocation4], %s2474
      %s2476 = sshll.u32 [#allocation5], 4
      %s2477 = int_to_ptr.vmem [resolvable:$true] %s2476
      %2482 = dma.vmem_to_hbm [thread:$0]  %s2477, 17408, %s1, [#allocation4], 1024, 1024, 64
    $region13: #{tpu_custom_call.1} parent=1 // pred_fallthru
      _
    // Predicated region
    $region14: #{tpu_custom_call.1} parent=1 // pred_check
      _
    $region15: #{tpu_custom_call.1} parent=1 // pred_check_branch
      %2484 = sbr.rel (0) target = $region17
    $region16: #{tpu_custom_call.1} parent=1 // pred_region
      %2485 = dma.done [#allocation4], 17408
    $region17: #{tpu_custom_call.1} parent=1 // pred_fallthru
      _
    %2486 = vsyncpa [#allocation3], 1
    %2487 = vsyncpa [#allocation4], 1

</llo_original>
